<compile_context>
chip_gen: v7x
topology: tpu7x:2x2x1
jax: 0.10.0
libtpu: 0.0.40
codegen_flags: <defaults>
</compile_context>

<pallas_src>
from typing import Any, NamedTuple

import jax
import jax.numpy as jnp
from jax import lax
from jax.experimental import pallas as pl
from jax.experimental.pallas import tpu as pltpu


def _round_up(a, b):
    return (a + b - 1) // b * b


def _pick_tile(n, align, max_tile):
    """Pick a tile (multiple of `align`, <= max_tile) minimizing padding waste.

    Ties prefer the larger tile (better reuse / fewer grid steps)."""
    best_t = align
    best_waste = _round_up(n, align) - n
    t = align
    while t <= max_tile:
        waste = _round_up(n, t) - n
        if waste <= best_waste:
            best_t, best_waste = t, waste
        t += align
    return best_t


class CollectorLinearParams(NamedTuple):
    w_padded: jax.Array      # [Kp, Np] pre-transposed, pre-padded, compute dtype
    b_padded: jax.Array      # [1, Np]
    w_t: jax.Array           # [K, N]  pre-transposed, original dtype (topk / fallback)
    bias: jax.Array          # [N]
    n: int
    k: int
    tn: int
    tk: int
    topk: int
    compute_dtype: Any


def prepare_collector_linear(weight, bias, topk_ratio, *,
                             compute_dtype=jnp.bfloat16,
                             tn_max=1024, tk_max=512):
    """One-time weight preparation (hoisted out of the forward path).

    weight: (out_features, in_features)  [nn.Linear convention]
    bias:   (out_features,)
    """
    N, K = weight.shape
    tn = _pick_tile(N, 128, tn_max)
    tk = _pick_tile(K, 128, tk_max)
    Np, Kp = _round_up(N, tn), _round_up(K, tk)

    w_t = jnp.transpose(weight)                    # [K, N]
    w_p = w_t.astype(compute_dtype)
    if (Kp, Np) != (K, N):
        w_p = jnp.pad(w_p, ((0, Kp - K), (0, Np - N)))

    b_p = bias.reshape(1, N)
    if Np != N:
        b_p = jnp.pad(b_p, ((0, 0), (0, Np - N)))

    topk = int(K * float(topk_ratio))              # matches the PyTorch module
    return CollectorLinearParams(
        w_padded=w_p, b_padded=b_p, w_t=w_t, bias=bias,
        n=N, k=K, tn=tn, tk=tk, topk=topk,
        compute_dtype=jnp.dtype(compute_dtype))


# ---------------------------------------------------------------------------
# Dense path: tiled MXU matmul  y = x @ W.T + b   (W supplied as [K, N])
# ---------------------------------------------------------------------------
def _linear_kernel(x_ref, w_ref, b_ref, o_ref, acc_ref):
    # x_ref: (tm, tk)   w_ref: (tk, tn)   b_ref: (1, tn)   o_ref: (tm, tn)
    k = pl.program_id(2)

    @pl.when(k == 0)
    def _init():
        acc_ref[...] = jnp.zeros_like(acc_ref)

    # Standard contraction: x lane dim against W sublane dim -> no W-tile
    # re-layout on the MXU path.
    acc_ref[...] += jnp.dot(x_ref[...], w_ref[...],
                            preferred_element_type=jnp.float32)

    @pl.when(k == pl.num_programs(2) - 1)
    def _epilogue():
        o_ref[...] = (acc_ref[...]
                      + b_ref[...].astype(jnp.float32)).astype(o_ref.dtype)


def _pallas_linear(x2d, params: CollectorLinearParams, *,
                   tm_max=512, force_pallas=False):
    """y = x2d @ W.T + b with W pre-prepared as padded [Kp, Np]."""
    M, K = x2d.shape
    N = params.n
    Kp, Np = params.w_padded.shape
    tn_, tk_ = params.tn, params.tk
    cd = params.compute_dtype

    # Row tile: full (padded) M for small problems, padding-aware otherwise.
    if M <= 128:
        tm_ = _round_up(M, 8)
    else:
        tm_ = _pick_tile(M, 128, tm_max)
    Mp = _round_up(M, tm_)

    grid_m, grid_n, grid_k = Mp // tm_, Np // tn_, Kp // tk_

    # Small-problem fallback: a 1-step grid is dominated by per-step overhead
    # and padding copies; let XLA's fused dot handle it.
    if (not force_pallas) and grid_m * grid_n * grid_k <= 1:
        y = x2d @ params.w_t + params.bias[None, :]
        return y.astype(x2d.dtype)

    # Guarantee >= 2 parallel blocks so both TensorCores are used (v7x).
    if grid_m * grid_n < 2:
        if grid_n == 1 and tn_ % 256 == 0:
            tn_ //= 2
        elif grid_m == 1 and tm_ % 16 == 0:
            tm_ //= 2
        grid_m, grid_n = Mp // tm_, Np // tn_

    # Activations: cast to compute dtype (bf16 default) + pad if needed.
    x_p = x2d.astype(cd)
    if (Mp, Kp) != (M, K):
        x_p = jnp.pad(x_p, ((0, Mp - M), (0, Kp - K)))

    cd_size = jnp.dtype(cd).itemsize
    out_size = jnp.dtype(x2d.dtype).itemsize
    b_size = jnp.dtype(params.b_padded.dtype).itemsize
    # double-buffered x / W / out tiles + bias + f32 accumulator
    vmem_need = (2 * (tm_ * tk_ + tk_ * tn_) * cd_size
                 + 2 * tm_ * tn_ * out_size
                 + 2 * tn_ * b_size
                 + tm_ * tn_ * 4)
    # <= 48 MiB keeps v7x's 64 MiB/TC comfortable; bf16 tiles fit easily.
    vmem_limit = int(min(max(2 * vmem_need, 16 * 1024 * 1024), 48 * 1024 * 1024))

    grid = (grid_m, grid_n, grid_k)

    out = pl.pallas_call(
        _linear_kernel,
        out_shape=jax.ShapeDtypeStruct((Mp, Np), x2d.dtype),
        grid_spec=pltpu.PrefetchScalarGridSpec(
            num_scalar_prefetch=0,
            grid=grid,
            in_specs=[
                pl.BlockSpec((tm_, tk_), lambda i, j, k: (i, k)),   # x tile
                pl.BlockSpec((tk_, tn_), lambda i, j, k: (k, j)),   # W tile ([K,N])
                pl.BlockSpec((1, tn_), lambda i, j, k: (0, j)),     # bias slice
            ],
            out_specs=pl.BlockSpec((tm_, tn_), lambda i, j, k: (i, j)),
            scratch_shapes=[pltpu.VMEM((tm_, tn_), jnp.float32)],
        ),
        compiler_params=pltpu.CompilerParams(
            dimension_semantics=("parallel", "parallel", "arbitrary"),
            vmem_limit_bytes=vmem_limit,
        ),
        cost_estimate=pl.CostEstimate(
            flops=2 * Mp * Np * Kp,
            transcendentals=0,
            # Account for re-streaming: x is read grid_n times, W grid_m times.
            bytes_accessed=((Mp * Kp * grid_n + Np * Kp * grid_m) * cd_size
                            + Mp * Np * out_size),
        ),
    )(x_p, params.w_padded, params.b_padded)

    if (Mp, Np) != (M, N):
        out = out[:M, :N]
    return out


# ---------------------------------------------------------------------------
# Decode path (bsz*seq == 1): top-k column selection + row-gathered GEMV.
# ---------------------------------------------------------------------------
def _topk_gemv(x_row, params: CollectorLinearParams):
    N = params.n
    topk = params.topk
    if topk <= 0:
        # Empty contraction in the PyTorch module -> just the bias.
        return jnp.broadcast_to(params.bias[None, :], (1, N)).astype(x_row.dtype)
    # softmax(|x|) is monotonic in |x| => top-k of |x| yields the same indices.
    absx = jnp.abs(x_row.reshape(-1)).astype(jnp.float32)
    _, idx = lax.top_k(absx, topk)
    x_sel = jnp.take(x_row, idx, axis=1)            # (1, topk)
    w_sel = jnp.take(params.w_t, idx, axis=0)       # (topk, N) row-contiguous gather
    return x_sel @ w_sel + params.bias[None, :]


# ---------------------------------------------------------------------------
# Forward
# ---------------------------------------------------------------------------
def collector_linear_forward(x, params: CollectorLinearParams, *,
                             force_pallas=False):
    """Forward pass of CollectorLinear.

    x: (bsz, seq, in_features);  params from prepare_collector_linear().
    """
    bsz, seq, in_f = x.shape
    xm = x.reshape(bsz * seq, in_f)

    if bsz * seq == 1:
        y = _topk_gemv(xm, params)
    else:
        y = _pallas_linear(xm, params, force_pallas=force_pallas)

    return y.reshape(bsz, seq, params.n)


if __name__ == "__main__":
    key = jax.random.PRNGKey(0)
    ks = jax.random.split(key, 8)

    topk_ratio = 0.5

    # ---- Case A: dense path, bf16 compute, multi-step grid --------------
    bsz, seq = 2, 64                       # M = 128
    in_f, out_f = 768, 640
    bound = 1.0 / (in_f ** 0.5)
    weight = jax.random.uniform(ks[0], (out_f, in_f), jnp.float32, -bound, bound)
    bias = jax.random.uniform(ks[1], (out_f,), jnp.float32, -bound, bound)
    params_bf16 = prepare_collector_linear(weight, bias, topk_ratio)  # bf16 weights

    x = jax.random.normal(ks[2], (bsz, seq, in_f), jnp.float32)
    y = collector_linear_forward(x, params_bf16)
    y = jax.block_until_ready(y)
    assert y.shape == (bsz, seq, out_f)

    # Reference with bf16-quantized operands (matches the kernel's MXU inputs).
    xq = x.astype(jnp.bfloat16).astype(jnp.float32)
    wq = weight.astype(jnp.bfloat16).astype(jnp.float32)
    y_ref_q = (xq.reshape(-1, in_f) @ wq.T + bias).reshape(bsz, seq, out_f)
    assert jnp.allclose(y, y_ref_q, atol=2e-3, rtol=2e-3)
    # Loose sanity check against the full-precision reference.
    y_ref_f32 = (x.reshape(-1, in_f) @ weight.T + bias).reshape(bsz, seq, out_f)
    assert jnp.allclose(y, y_ref_f32, atol=5e-2, rtol=5e-2)

    # ---- Case B: ragged shapes, f32 compute, forced Pallas (padding path) -
    b2_, s2_, in2, out2 = 3, 8, 200, 168
    w2 = jax.random.uniform(ks[3], (out2, in2), jnp.float32, -0.1, 0.1)
    bb2 = jax.random.uniform(ks[4], (out2,), jnp.float32, -0.1, 0.1)
    params_f32 = prepare_collector_linear(w2, bb2, topk_ratio,
                                          compute_dtype=jnp.float32)
    x2 = jax.random.normal(ks[5], (b2_, s2_, in2), jnp.float32)
    y2 = collector_linear_forward(x2, params_f32, force_pallas=True)
    y2 = jax.block_until_ready(y2)
    y2_ref = (x2.reshape(-1, in2) @ w2.T + bb2).reshape(b2_, s2_, out2)
    assert jnp.allclose(y2, y2_ref, atol=1e-4, rtol=1e-4)

    # ---- Case C: bsz*seq == 1 -> top-k row-gathered GEMV ------------------
    x1 = jax.random.normal(ks[6], (1, 1, in_f), jnp.float32)
    y1 = collector_linear_forward(x1, params_bf16)
    y1 = jax.block_until_ready(y1)

    topk = int(in_f * topk_ratio)
    absx = jnp.abs(x1.reshape(-1))
    _, idx_ref = lax.top_k(absx, topk)
    y1_ref = (x1.reshape(1, -1)[:, idx_ref] @ weight[:, idx_ref].T + bias)
    y1_ref = y1_ref.reshape(1, 1, out_f)
    assert jnp.allclose(y1, y1_ref, atol=1e-5, rtol=1e-5)

    print("KERNEL_OK")
</pallas_src>

<mosaic_0001>
module attributes {stable_mosaic.version = 11 : i64} {
  func.func @_linear_kernel(%arg0: i32, %arg1: i32, %arg2: i32, %arg3: memref<64x384xbf16, #tpu.memory_space<vmem>>, %arg4: memref<384x640xbf16, #tpu.memory_space<vmem>>, %arg5: memref<1x640xf32, #tpu.memory_space<vmem>>, %arg6: memref<64x640xf32, #tpu.memory_space<vmem>>, %arg7: memref<64x640xf32, #tpu.memory_space<vmem>>) attributes {dimension_semantics = [#tpu.dimension_semantics<parallel>, #tpu.dimension_semantics<parallel>, #tpu.dimension_semantics<arbitrary>], iteration_bounds = array<i64: 2, 1, 2>, scalar_prefetch = 0 : i64, scratch_operands = 1 : i64, tpu.core_type = #tpu.core_type<tc>, window_params = [{transform_indices = @transform_0, window_bounds = array<i64: 64, 384>}, {transform_indices = @transform_1, window_bounds = array<i64: 384, 640>}, {transform_indices = @transform_2, window_bounds = array<i64: 1, 640>}, {transform_indices = @transform_3, window_bounds = array<i64: 64, 640>}]} {
    %c0_i32 = arith.constant 0 : i32
    %0 = arith.cmpi eq, %arg2, %c0_i32 : i32
    %1 = arith.extui %0 : i1 to i32
    %c0_i32_0 = arith.constant 0 : i32
    %2 = arith.cmpi ne, %1, %c0_i32_0 : i32
    scf.if %2 {
      %cst_9 = arith.constant 0.000000e+00 : f32
      %12 = vector.broadcast %cst_9 : f32 to vector<64x640xf32>
      %c0_10 = arith.constant 0 : index
      %c0_11 = arith.constant 0 : index
      %13 = vector.load %arg7[%c0_10, %c0_11] : memref<64x640xf32, #tpu.memory_space<vmem>>, vector<64x640xf32>
      tpu.vector_store %arg7[%c0_10, %c0_11], %12 {strides = array<i32>} : memref<64x640xf32, #tpu.memory_space<vmem>>, vector<64x640xf32>,
    } else {
    }
    %c0 = arith.constant 0 : index
    %c0_1 = arith.constant 0 : index
    %3 = vector.load %arg7[%c0, %c0_1] : memref<64x640xf32, #tpu.memory_space<vmem>>, vector<64x640xf32>
    %c0_2 = arith.constant 0 : index
    %c0_3 = arith.constant 0 : index
    %4 = vector.load %arg3[%c0_2, %c0_3] : memref<64x384xbf16, #tpu.memory_space<vmem>>, vector<64x384xbf16>
    %c0_4 = arith.constant 0 : index
    %c0_5 = arith.constant 0 : index
    %5 = vector.load %arg4[%c0_4, %c0_5] : memref<384x640xbf16, #tpu.memory_space<vmem>>, vector<384x640xbf16>
    %cst = arith.constant dense<0.000000e+00> : vector<64x640xf32>
    %6 = tpu.matmul %4, %5, %cst {dimension_numbers = #tpu.dot_dimension_numbers<[1], [0], [0], [1], [0, 0, 1, 1], [], []>} : vector<64x384xbf16>, vector<384x640xbf16>, vector<64x640xf32> -> vector<64x640xf32>
    %7 = arith.addf %3, %6 : vector<64x640xf32>
    %c0_6 = arith.constant 0 : index
    %c0_7 = arith.constant 0 : index
    %8 = vector.load %arg7[%c0_6, %c0_7] : memref<64x640xf32, #tpu.memory_space<vmem>>, vector<64x640xf32>
    tpu.vector_store %arg7[%c0_6, %c0_7], %7 {strides = array<i32>} : memref<64x640xf32, #tpu.memory_space<vmem>>, vector<64x640xf32>,
    %c1_i32 = arith.constant 1 : i32
    %9 = arith.cmpi eq, %arg2, %c1_i32 : i32
    %10 = arith.extui %9 : i1 to i32
    %c0_i32_8 = arith.constant 0 : i32
    %11 = arith.cmpi ne, %10, %c0_i32_8 : i32
    scf.if %11 {
      %c0_9 = arith.constant 0 : index
      %c0_10 = arith.constant 0 : index
      %12 = vector.load %arg7[%c0_9, %c0_10] : memref<64x640xf32, #tpu.memory_space<vmem>>, vector<64x640xf32>
      %c0_11 = arith.constant 0 : index
      %c0_12 = arith.constant 0 : index
      %13 = vector.load %arg5[%c0_11, %c0_12] : memref<1x640xf32, #tpu.memory_space<vmem>>, vector<1x640xf32>
      %14 = vector.broadcast %13 : vector<1x640xf32> to vector<64x640xf32>
      %15 = arith.addf %12, %14 : vector<64x640xf32>
      %c0_13 = arith.constant 0 : index
      %c0_14 = arith.constant 0 : index
      %16 = vector.load %arg6[%c0_13, %c0_14] : memref<64x640xf32, #tpu.memory_space<vmem>>, vector<64x640xf32>
      tpu.vector_store %arg6[%c0_13, %c0_14], %15 {strides = array<i32>} : memref<64x640xf32, #tpu.memory_space<vmem>>, vector<64x640xf32>,
    } else {
    }
    return
  }
  func.func @transform_0(%arg0: i32, %arg1: i32, %arg2: i32) -> (i32, i32) {
    %c0_i32 = arith.constant 0 : i32
    return %arg0, %arg2 : i32, i32
  }
  func.func @transform_1(%arg0: i32, %arg1: i32, %arg2: i32) -> (i32, i32) {
    %c0_i32 = arith.constant 0 : i32
    return %arg2, %arg1 : i32, i32
  }
  func.func @transform_2(%arg0: i32, %arg1: i32, %arg2: i32) -> (i32, i32) {
    %c0_i32 = arith.constant 0 : i32
    %c0_i32_0 = arith.constant 0 : i32
    return %c0_i32, %arg1 : i32, i32
  }
  func.func @transform_3(%arg0: i32, %arg1: i32, %arg2: i32) -> (i32, i32) {
    %c0_i32 = arith.constant 0 : i32
    return %arg0, %arg1 : i32, i32
  }
}

</mosaic_0001>

<llo_original>
// kernel: tpu_custom_call.1
$region0: #{tpu_custom_call.1}
  #allocation0 [shape = 'u32[]', space=smem, size = 0x4, offset = 0x4, fixed_abs, tag = 'smem constant byte address 0x4 - core index']
  #allocation1 [shape = 'u32[144,128]{1,0:T(1,128)}', space=vmem, size = 0x12000, scoped, tag = 'internal scratch']
  #allocation2 [shape = 'f32[64,640]{1,0:T(8,128)}', space=vmem, size = 0x28000, scoped, tag = 'scratch operand']
  %s0 = inlined_call_operand.hbm [shape: bf16[128,768], index: 0, kind: input, shape index: {}]
  %s1 = inlined_call_operand.hbm [shape: bf16[768,640], index: 1, kind: input, shape index: {}]
  %s2 = inlined_call_operand.vmem [shape: f32[1,640], index: 2, kind: input, shape index: {}]
  %s3 = inlined_call_operand.hbm [shape: f32[128,640], index: 3, kind: output, shape index: {}]
  %s4 = sld [smem:[#allocation0]]
  $region61: #{tpu_custom_call.1} parent=0
    _
  %s6 = ssub.s32 1, %s4
  %s7 = scalar_select 0, %s6, %s4
  $region1: #{tpu_custom_call.1} parent=0
    #allocation3 [shape = 'u8[98304]{0}', space=vmem, size = 0x18000, scoped, tag = 'input window, operand 0']
    #allocation4 [shape = 's32[2]{0}', space=sflag, size = 0x8, scoped, tag = 'scoped memory for tpu_custom_call.1']
    #allocation5 [shape = 's32[2]{0}', space=sflag, size = 0x8, scoped, tag = 'scoped memory for tpu_custom_call.1']
    #allocation6 [shape = 'u8[983040]{0}', space=vmem, size = 0xf0000, scoped, tag = 'input window, operand 1']
    #allocation7 [shape = 's32[2]{0}', space=sflag, size = 0x8, scoped, tag = 'scoped memory for tpu_custom_call.1']
    #allocation8 [shape = 'u8[327680]{0}', space=vmem, size = 0x50000, scoped, tag = 'output window, operand 0']
    %8 = vsyncpa [#allocation4], 0
    %s9 = scalar_lea.sflag [#allocation4], 1
    %10 = vsyncpa %s9, 0
    %11 = vsyncpa [#allocation7], 0
    %s12 = scalar_lea.sflag [#allocation7], 1
    %13 = vsyncpa %s12, 0
    %14 = vsyncpa [#allocation5], 0
    %s15 = scalar_lea.sflag [#allocation5], 1
    %16 = vsyncpa %s15, 0
    loop: start=0, step=1, limit=6
    $region2: #{tpu_custom_call.1} parent=1 // loop_pre_header
      _
    $region3: #{tpu_custom_call.1} parent=1 // loop_header
      %s18 = sphi 0, %s22
      %p19 = scmp.ge.s32.totalorder %s18, 6
      %s25 = sphi 0, %s44
      %s26 = sphi 0, %s40
      %s27 = sphi 0, %s36
      %s28 = sphi 0, %s25
      %s29 = sphi 0, %s26
      %s30 = sphi 0, %s27
      %s31 = sphi 0, %s28
      %s32 = sphi 0, %s29
      %s33 = sphi 0, %s30
      %s49 = sphi 0, %s51
      %s52 = sphi 0, %s49
      %s53 = sphi 0, %s52
      %s69 = sphi 0, %s53
      %s77 = sphi 0, %s79
      %s80 = sphi 0, %s77
      %s81 = sphi 0, %s80
      %s97 = sphi 0, %s81
      %s103 = sphi 0, %s105
      %s106 = sphi 0, %s103
      %s107 = sphi 0, %s106
      %s123 = sphi 0, %s107
      %s131 = sphi 0, %s133
      %s134 = sphi 0, %s131
      %s135 = sphi 0, %s134
      %s151 = sphi 0, %s135
    $region4: #{tpu_custom_call.1} parent=1 // loop_header_branch
      %21 = sbr.rel (%p19) target = $region8
    $region5: #{tpu_custom_call.1} parent=1 // loop_body
      %s23 = ssub.s32 %s18, 1
      %s24 = ssub.s32 %s18, 2
      %s34 = sadd.s32 1, %s27
      %p35 = scmp.ge.s32.totalorder %s34, 2
      %s36 = scalar_select %p35, 0, %s34
      %s37 = sadd.s32 1, %s26
      %s38 = scalar_select %p35, %s37, %s26
      %p39 = scmp.ge.s32.totalorder %s38, 1
      %s40 = scalar_select %p39, 0, %s38
      %s41 = sadd.s32 1, %s25
      %s42 = scalar_select %p39, %s41, %s25
      %p43 = scmp.ge.s32.totalorder %s42, 2
      %s44 = scalar_select %p43, 0, %s42
      %s45 = ssub.s32 %s25, %s44
      %s46 = ssub.s32 %s27, %s36
      %s47 = sor.u32 %s45, %s46
      %p48 = scmp.eq.s32.totalorder %s47, 0
      %s50 = sadd.s32 %s49, 1
      %s51 = scalar_select %p48, %s49, %s50
      %p54 = pneg %p48
      %p55 = scmp.eq.s32.totalorder %s18, 3
      %p56 = por %p54, %p55
      %p57 = scmp.ne.s32.totalorder %s49, %s52
      %p58 = scmp.eq.s32.totalorder %s18, 0
      %p59 = por %p57, %p58
      %p60 = scmp.ne.s32.totalorder %s49, %s52
      %p61 = scmp.eq.s32.totalorder %s23, 3
      %p62 = por %p60, %p61
      %p63 = scmp.ne.s32.totalorder %s52, %s53
      %p64 = scmp.eq.s32.totalorder %s23, 0
      %p65 = por %p63, %p64
      %p66 = scmp.ne.s32.totalorder %s52, %s53
      %p67 = scmp.eq.s32.totalorder %s24, 3
      %p68 = por %p66, %p67
      %p70 = scmp.ne.s32.totalorder %s53, %s69
      %p71 = scmp.eq.s32.totalorder %s24, 0
      %p72 = por %p70, %p71
      %s73 = ssub.s32 %s27, %s36
      %s74 = ssub.s32 %s26, %s40
      %s75 = sor.u32 %s73, %s74
      %p76 = scmp.eq.s32.totalorder %s75, 0
      %s78 = sadd.s32 %s77, 1
      %s79 = scalar_select %p76, %s77, %s78
      %p82 = pneg %p76
      %p83 = scmp.eq.s32.totalorder %s18, 3
      %p84 = por %p82, %p83
      %p85 = scmp.ne.s32.totalorder %s77, %s80
      %p86 = scmp.eq.s32.totalorder %s18, 0
      %p87 = por %p85, %p86
      %p88 = scmp.ne.s32.totalorder %s77, %s80
      %p89 = scmp.eq.s32.totalorder %s23, 3
      %p90 = por %p88, %p89
      %p91 = scmp.ne.s32.totalorder %s80, %s81
      %p92 = scmp.eq.s32.totalorder %s23, 0
      %p93 = por %p91, %p92
      %p94 = scmp.ne.s32.totalorder %s80, %s81
      %p95 = scmp.eq.s32.totalorder %s24, 3
      %p96 = por %p94, %p95
      %p98 = scmp.ne.s32.totalorder %s81, %s97
      %p99 = scmp.eq.s32.totalorder %s24, 0
      %p100 = por %p98, %p99
      %s101 = ssub.s32 %s26, %s40
      %p102 = scmp.eq.s32.totalorder %s101, 0
      %s104 = sadd.s32 %s103, 1
      %s105 = scalar_select %p102, %s103, %s104
      %p108 = pneg %p102
      %p109 = scmp.eq.s32.totalorder %s18, 3
      %p110 = por %p108, %p109
      %p111 = scmp.ne.s32.totalorder %s103, %s106
      %p112 = scmp.eq.s32.totalorder %s18, 0
      %p113 = por %p111, %p112
      %p114 = scmp.ne.s32.totalorder %s103, %s106
      %p115 = scmp.eq.s32.totalorder %s23, 3
      %p116 = por %p114, %p115
      %p117 = scmp.ne.s32.totalorder %s106, %s107
      %p118 = scmp.eq.s32.totalorder %s23, 0
      %p119 = por %p117, %p118
      %p120 = scmp.ne.s32.totalorder %s106, %s107
      %p121 = scmp.eq.s32.totalorder %s24, 3
      %p122 = por %p120, %p121
      %p124 = scmp.ne.s32.totalorder %s107, %s123
      %p125 = scmp.eq.s32.totalorder %s24, 0
      %p126 = por %p124, %p125
      %s127 = ssub.s32 %s25, %s44
      %s128 = ssub.s32 %s26, %s40
      %s129 = sor.u32 %s127, %s128
      %p130 = scmp.eq.s32.totalorder %s129, 0
      %s132 = sadd.s32 %s131, 1
      %s133 = scalar_select %p130, %s131, %s132
      %p136 = pneg %p130
      %p137 = scmp.eq.s32.totalorder %s18, 3
      %p138 = por %p136, %p137
      %p139 = scmp.ne.s32.totalorder %s131, %s134
      %p140 = scmp.eq.s32.totalorder %s18, 0
      %p141 = por %p139, %p140
      %p142 = scmp.ne.s32.totalorder %s131, %s134
      %p143 = scmp.eq.s32.totalorder %s23, 3
      %p144 = por %p142, %p143
      %p145 = scmp.ne.s32.totalorder %s134, %s135
      %p146 = scmp.eq.s32.totalorder %s23, 0
      %p147 = por %p145, %p146
      %p148 = scmp.ne.s32.totalorder %s134, %s135
      %p149 = scmp.eq.s32.totalorder %s24, 3
      %p150 = por %p148, %p149
      %p152 = scmp.ne.s32.totalorder %s135, %s151
      %p153 = scmp.eq.s32.totalorder %s24, 0
      %p154 = por %p152, %p153
      %p155 = scmp.le.s32.totalorder 1, %s18
      %p156 = scmp.lt.s32.totalorder %s18, 5
      %p157 = pnand %p155, %p156
      %p158 = pneg %p157
      // Predicated region
      $region9: #{tpu_custom_call.1} parent=5 // pred_check
        _
      $region10: #{tpu_custom_call.1} parent=5 // pred_check_branch
        %160 = sbr.rel (%p157) target = $region12
      $region11: #{tpu_custom_call.1} parent=5 // pred_region
        %s161 = ssub.s32 %s18, 1
        // Predicated region
        $region13: #{tpu_custom_call.1} parent=11 // pred_check
          %p162 = pneg %p119
        $region14: #{tpu_custom_call.1} parent=11 // pred_check_branch
          %164 = sbr.rel (%p162) target = $region16
        $region15: #{tpu_custom_call.1} parent=11 // pred_region
          %s165 = smul.u32 5, %s29
          %p166 = scmp.lt.s32.totalorder %s165, 4
          %s167 = scalar_select %p166, %s165, 4
          %s168 = scalar_lea.vmem %s2, %s167
          %s169 = smul.u32 5, %s29
        $region16: #{tpu_custom_call.1} parent=11 // pred_fallthru
          _
      $region12: #{tpu_custom_call.1} parent=5 // pred_fallthru
        _
      %p170 = scmp.lt.s32.totalorder %s18, 4
      // Predicated region
      $region17: #{tpu_custom_call.1} parent=5 // pred_check
        %p171 = pneg %p170
      $region18: #{tpu_custom_call.1} parent=5 // pred_check_branch
        %173 = sbr.rel (%p171) target = $region20
      $region19: #{tpu_custom_call.1} parent=5 // pred_region
        // Predicated region
        $region21: #{tpu_custom_call.1} parent=19 // pred_check
          %p174 = pneg %p59
        $region22: #{tpu_custom_call.1} parent=19 // pred_check_branch
          %176 = sbr.rel (%p174) target = $region24
        $region23: #{tpu_custom_call.1} parent=19 // pred_region
          %s177 = sand.u32 %s49, 1
          %s178 = scalar_lea.sflag [#allocation4], %s177
          %s179 = sand.u32 %s49, 1
          %s180 = smul.addr %s179, 96
          %s181 = scalar_lea.vmem [#allocation3], %s180
          %s182 = smul.u32 8, %s25
          %s183 = smul.u32 3, %s27
          %s185 = ssub.s32 1536, 1536
          %186 = vsyncadd %s178, %s185
          %s187 = smul.addr %s182, 6
          %s188 = sadd.s32 %s183, %s187
          %s189 = smul.addr %s188, 64
          %s190 = scalar_lea.hbm %s0, %s189
          %s191 = sshll.u32 %s181, 4
          %s192 = int_to_ptr.vmem [resolvable:$true] %s191
          %197 = dma.hbm_to_vmem [thread:$0]  %s190, 1536, %s192, %s178, 384, 192, 12
        $region24: #{tpu_custom_call.1} parent=19 // pred_fallthru
          _
        // Predicated region
        $region25: #{tpu_custom_call.1} parent=19 // pred_check
          %p198 = pneg %p87
        $region26: #{tpu_custom_call.1} parent=19 // pred_check_branch
          %200 = sbr.rel (%p198) target = $region28
        $region27: #{tpu_custom_call.1} parent=19 // pred_region
          %s201 = sand.u32 %s77, 1
          %s202 = scalar_lea.sflag [#allocation7], %s201
          %s203 = sand.u32 %s77, 1
          %s204 = smul.addr %s203, 960
          %s205 = scalar_lea.vmem [#allocation6], %s204
          %s206 = smul.u32 48, %s27
          %s207 = smul.u32 5, %s26
          %s209 = ssub.s32 15360, 15360
          %210 = vsyncadd %s202, %s209
          %s211 = smul.addr %s206, 5
          %s212 = sadd.s32 %s207, %s211
          %s213 = smul.addr %s212, 64
          %s214 = scalar_lea.hbm %s1, %s213
          %s215 = sshll.u32 %s205, 4
          %s216 = int_to_ptr.vmem [resolvable:$true] %s215
          %221 = dma.hbm_to_vmem [thread:$0]  %s214, 15360, %s216, %s202, 320, 320, 20
        $region28: #{tpu_custom_call.1} parent=19 // pred_fallthru
          _
      $region20: #{tpu_custom_call.1} parent=5 // pred_fallthru
        _
      %p222 = scmp.le.s32.totalorder 1, %s18
      %p223 = scmp.lt.s32.totalorder %s18, 5
      %p224 = pnand %p222, %p223
      %p225 = pneg %p224
      // Predicated region
      $region29: #{tpu_custom_call.1} parent=5 // pred_check
        _
      $region30: #{tpu_custom_call.1} parent=5 // pred_check_branch
        %227 = sbr.rel (%p224) target = $region32
      $region31: #{tpu_custom_call.1} parent=5 // pred_region
        %s228 = ssub.s32 %s18, 1
        %s229 = sand.u32 %s52, 1
        %s230 = scalar_lea.sflag [#allocation4], %s229
        %s231 = sand.u32 %s52, 1
        %s232 = smul.addr %s231, 96
        %s233 = scalar_lea.vmem [#allocation3], %s232
        // Predicated region
        $region33: #{tpu_custom_call.1} parent=31 // pred_check
          %p234 = pneg %p65
        $region34: #{tpu_custom_call.1} parent=31 // pred_check_branch
          %236 = sbr.rel (%p234) target = $region36
        $region35: #{tpu_custom_call.1} parent=31 // pred_region
          %237 = dma.done %s230, 1536
        $region36: #{tpu_custom_call.1} parent=31 // pred_fallthru
          _
        %s238 = sand.u32 %s80, 1
        %s239 = scalar_lea.sflag [#allocation7], %s238
        %s240 = sand.u32 %s80, 1
        %s241 = smul.addr %s240, 960
        %s242 = scalar_lea.vmem [#allocation6], %s241
        // Predicated region
        $region37: #{tpu_custom_call.1} parent=31 // pred_check
          %p243 = pneg %p93
        $region38: #{tpu_custom_call.1} parent=31 // pred_check_branch
          %245 = sbr.rel (%p243) target = $region40
        $region39: #{tpu_custom_call.1} parent=31 // pred_region
          %246 = dma.done %s239, 15360
        $region40: #{tpu_custom_call.1} parent=31 // pred_fallthru
          _
        %s247 = sand.u32 %s52, 1
        %s248 = scalar_lea.sflag [#allocation4], %s247
        %s249 = sand.u32 %s52, 1
        %s250 = smul.addr %s249, 96
        %s251 = scalar_lea.vmem [#allocation3], %s250
        %p252 = pneg %p65
        %p253 = pneg %p62
        %s254 = sand.u32 %s80, 1
        %s255 = scalar_lea.sflag [#allocation7], %s254
        %s256 = sand.u32 %s80, 1
        %s257 = smul.addr %s256, 960
        %s258 = scalar_lea.vmem [#allocation6], %s257
        %p259 = pneg %p93
        %p260 = pneg %p90
        %s261 = smul.u32 5, %s29
        %p262 = scmp.lt.s32.totalorder %s261, 4
        %s263 = scalar_select %p262, %s261, 4
        %s264 = scalar_lea.vmem %s2, %s263
        %p265 = pneg %p119
        %p266 = pneg %p116
        %p267 = pneg %p147
        %p268 = pneg %p144
        %s269 = sand.u32 %s134, 1
        %s270 = scalar_lea.sflag [#allocation5], %s269
        %s271 = sand.u32 %s134, 1
        %s272 = smul.addr %s271, 320
        %s273 = scalar_lea.vmem [#allocation8], %s272
        %s274 = smul.u32 8, %s28
        %s275 = smul.u32 3, %s30
        %s276 = smul.u32 48, %s30
        %s277 = smul.u32 5, %s29
        %s278 = smul.u32 5, %s29
        %p279 = scmp.lt.s32.totalorder %s278, 4
        %s280 = scalar_select %p279, %s278, 4
        %s281 = scalar_lea.vmem %s2, %s280
        %s282 = smul.u32 5, %s29
        %s283 = smul.u32 8, %s28
        %s284 = smul.u32 5, %s29
        %p286 = scmp.eq.s32.totalorder %s30, 0
        // Predicated region
        $region41: #{tpu_custom_call.1} parent=31 // pred_check
          %p287 = pneg %p286
        $region42: #{tpu_custom_call.1} parent=31 // pred_check_branch
          %289 = sbr.rel (%p287) target = $region44
        $region43: #{tpu_custom_call.1} parent=31 // pred_region
          %290 = vst [vmem:[#allocation2] sm:$0xff] 0.0
          %291 = vst [vmem:[#allocation2 + $0x8] sm:$0xff] 0.0
          %292 = vst [vmem:[#allocation2 + $0x10] sm:$0xff] 0.0
          %293 = vst [vmem:[#allocation2 + $0x18] sm:$0xff] 0.0
          %294 = vst [vmem:[#allocation2 + $0x20] sm:$0xff] 0.0
          %295 = vst [vmem:[#allocation2 + $0x28] sm:$0xff] 0.0
          %296 = vst [vmem:[#allocation2 + $0x30] sm:$0xff] 0.0
          %297 = vst [vmem:[#allocation2 + $0x38] sm:$0xff] 0.0
          %298 = vst [vmem:[#allocation2 + $0x40] sm:$0xff] 0.0
          %299 = vst [vmem:[#allocation2 + $0x48] sm:$0xff] 0.0
          %300 = vst [vmem:[#allocation2 + $0x50] sm:$0xff] 0.0
          %301 = vst [vmem:[#allocation2 + $0x58] sm:$0xff] 0.0
          %302 = vst [vmem:[#allocation2 + $0x60] sm:$0xff] 0.0
          %303 = vst [vmem:[#allocation2 + $0x68] sm:$0xff] 0.0
          %304 = vst [vmem:[#allocation2 + $0x70] sm:$0xff] 0.0
          %305 = vst [vmem:[#allocation2 + $0x78] sm:$0xff] 0.0
          %306 = vst [vmem:[#allocation2 + $0x80] sm:$0xff] 0.0
          %307 = vst [vmem:[#allocation2 + $0x88] sm:$0xff] 0.0
          %308 = vst [vmem:[#allocation2 + $0x90] sm:$0xff] 0.0
          %309 = vst [vmem:[#allocation2 + $0x98] sm:$0xff] 0.0
          %310 = vst [vmem:[#allocation2 + $0xa0] sm:$0xff] 0.0
          %311 = vst [vmem:[#allocation2 + $0xa8] sm:$0xff] 0.0
          %312 = vst [vmem:[#allocation2 + $0xb0] sm:$0xff] 0.0
          %313 = vst [vmem:[#allocation2 + $0xb8] sm:$0xff] 0.0
          %314 = vst [vmem:[#allocation2 + $0xc0] sm:$0xff] 0.0
          %315 = vst [vmem:[#allocation2 + $0xc8] sm:$0xff] 0.0
          %316 = vst [vmem:[#allocation2 + $0xd0] sm:$0xff] 0.0
          %317 = vst [vmem:[#allocation2 + $0xd8] sm:$0xff] 0.0
          %318 = vst [vmem:[#allocation2 + $0xe0] sm:$0xff] 0.0
          %319 = vst [vmem:[#allocation2 + $0xe8] sm:$0xff] 0.0
          %320 = vst [vmem:[#allocation2 + $0xf0] sm:$0xff] 0.0
          %321 = vst [vmem:[#allocation2 + $0xf8] sm:$0xff] 0.0
          %322 = vst [vmem:[#allocation2 + $0x100] sm:$0xff] 0.0
          %323 = vst [vmem:[#allocation2 + $0x108] sm:$0xff] 0.0
          %324 = vst [vmem:[#allocation2 + $0x110] sm:$0xff] 0.0
          %325 = vst [vmem:[#allocation2 + $0x118] sm:$0xff] 0.0
          %326 = vst [vmem:[#allocation2 + $0x120] sm:$0xff] 0.0
          %327 = vst [vmem:[#allocation2 + $0x128] sm:$0xff] 0.0
          %328 = vst [vmem:[#allocation2 + $0x130] sm:$0xff] 0.0
          %329 = vst [vmem:[#allocation2 + $0x138] sm:$0xff] 0.0
        $region44: #{tpu_custom_call.1} parent=31 // pred_fallthru
          _
        %v330 = vld [vmem:[#allocation2] sm:$0xff]
        %v331 = vld [vmem:[#allocation2 + $0x8] sm:$0xff]
        %v332 = vld [vmem:[#allocation2 + $0x10] sm:$0xff]
        %v333 = vld [vmem:[#allocation2 + $0x18] sm:$0xff]
        %v334 = vld [vmem:[#allocation2 + $0x20] sm:$0xff]
        %v335 = vld [vmem:[#allocation2 + $0x28] sm:$0xff]
        %v336 = vld [vmem:[#allocation2 + $0x30] sm:$0xff]
        %v337 = vld [vmem:[#allocation2 + $0x38] sm:$0xff]
        %v338 = vld [vmem:[#allocation2 + $0x40] sm:$0xff]
        %v339 = vld [vmem:[#allocation2 + $0x48] sm:$0xff]
        %v340 = vld [vmem:[#allocation2 + $0x50] sm:$0xff]
        %v341 = vld [vmem:[#allocation2 + $0x58] sm:$0xff]
        %v342 = vld [vmem:[#allocation2 + $0x60] sm:$0xff]
        %v343 = vld [vmem:[#allocation2 + $0x68] sm:$0xff]
        %v344 = vld [vmem:[#allocation2 + $0x70] sm:$0xff]
        %v345 = vld [vmem:[#allocation2 + $0x78] sm:$0xff]
        %v346 = vld [vmem:[#allocation2 + $0x80] sm:$0xff]
        %v347 = vld [vmem:[#allocation2 + $0x88] sm:$0xff]
        %v348 = vld [vmem:[#allocation2 + $0x90] sm:$0xff]
        %v349 = vld [vmem:[#allocation2 + $0x98] sm:$0xff]
        %v350 = vld [vmem:[#allocation2 + $0xa0] sm:$0xff]
        %v351 = vld [vmem:[#allocation2 + $0xa8] sm:$0xff]
        %v352 = vld [vmem:[#allocation2 + $0xb0] sm:$0xff]
        %v353 = vld [vmem:[#allocation2 + $0xb8] sm:$0xff]
        %v354 = vld [vmem:[#allocation2 + $0xc0] sm:$0xff]
        %v355 = vld [vmem:[#allocation2 + $0xc8] sm:$0xff]
        %v356 = vld [vmem:[#allocation2 + $0xd0] sm:$0xff]
        %v357 = vld [vmem:[#allocation2 + $0xd8] sm:$0xff]
        %v358 = vld [vmem:[#allocation2 + $0xe0] sm:$0xff]
        %v359 = vld [vmem:[#allocation2 + $0xe8] sm:$0xff]
        %v360 = vld [vmem:[#allocation2 + $0xf0] sm:$0xff]
        %v361 = vld [vmem:[#allocation2 + $0xf8] sm:$0xff]
        %v362 = vld [vmem:[#allocation2 + $0x100] sm:$0xff]
        %v363 = vld [vmem:[#allocation2 + $0x108] sm:$0xff]
        %v364 = vld [vmem:[#allocation2 + $0x110] sm:$0xff]
        %v365 = vld [vmem:[#allocation2 + $0x118] sm:$0xff]
        %v366 = vld [vmem:[#allocation2 + $0x120] sm:$0xff]
        %v367 = vld [vmem:[#allocation2 + $0x128] sm:$0xff]
        %v368 = vld [vmem:[#allocation2 + $0x130] sm:$0xff]
        %v369 = vld [vmem:[#allocation2 + $0x138] sm:$0xff]
        %v370 = vld [vmem:[%s233] sm:$0xff]
        %v371 = vld [vmem:[%s233 + $0x8] sm:$0xf]
        %v372 = vld [vmem:[%s233 + $0xc] sm:$0xff]
        %v373 = vld [vmem:[%s233 + $0x14] sm:$0xf]
        %v374 = vld [vmem:[%s233 + $0x18] sm:$0xff]
        %v375 = vld [vmem:[%s233 + $0x20] sm:$0xf]
        %v376 = vld [vmem:[%s233 + $0x24] sm:$0xff]
        %v377 = vld [vmem:[%s233 + $0x2c] sm:$0xf]
        %v378 = vld [vmem:[%s233 + $0x30] sm:$0xff]
        %v379 = vld [vmem:[%s233 + $0x38] sm:$0xf]
        %v380 = vld [vmem:[%s233 + $0x3c] sm:$0xff]
        %v381 = vld [vmem:[%s233 + $0x44] sm:$0xf]
        %v382 = vld [vmem:[%s233 + $0x48] sm:$0xff]
        %v383 = vld [vmem:[%s233 + $0x50] sm:$0xf]
        %v384 = vld [vmem:[%s233 + $0x54] sm:$0xff]
        %v385 = vld [vmem:[%s233 + $0x5c] sm:$0xf]
        %v386 = vld [vmem:[%s242] sm:$0xff]
        %v387 = vld [vmem:[%s242 + $0x8] sm:$0xff]
        %v388 = vld [vmem:[%s242 + $0x10] sm:$0xf]
        %v389 = vld [vmem:[%s242 + $0x14] sm:$0xff]
        %v390 = vld [vmem:[%s242 + $0x1c] sm:$0xff]
        %v391 = vld [vmem:[%s242 + $0x24] sm:$0xf]
        %v392 = vld [vmem:[%s242 + $0x28] sm:$0xff]
        %v393 = vld [vmem:[%s242 + $0x30] sm:$0xff]
        %v394 = vld [vmem:[%s242 + $0x38] sm:$0xf]
        %v395 = vld [vmem:[%s242 + $0x3c] sm:$0xff]
        %v396 = vld [vmem:[%s242 + $0x44] sm:$0xff]
        %v397 = vld [vmem:[%s242 + $0x4c] sm:$0xf]
        %v398 = vld [vmem:[%s242 + $0x50] sm:$0xff]
        %v399 = vld [vmem:[%s242 + $0x58] sm:$0xff]
        %v400 = vld [vmem:[%s242 + $0x60] sm:$0xf]
        %v401 = vld [vmem:[%s242 + $0x64] sm:$0xff]
        %v402 = vld [vmem:[%s242 + $0x6c] sm:$0xff]
        %v403 = vld [vmem:[%s242 + $0x74] sm:$0xf]
        %v404 = vld [vmem:[%s242 + $0x78] sm:$0xff]
        %v405 = vld [vmem:[%s242 + $0x80] sm:$0xff]
        %v406 = vld [vmem:[%s242 + $0x88] sm:$0xf]
        %v407 = vld [vmem:[%s242 + $0x8c] sm:$0xff]
        %v408 = vld [vmem:[%s242 + $0x94] sm:$0xff]
        %v409 = vld [vmem:[%s242 + $0x9c] sm:$0xf]
        %v410 = vld [vmem:[%s242 + $0xa0] sm:$0xff]
        %v411 = vld [vmem:[%s242 + $0xa8] sm:$0xff]
        %v412 = vld [vmem:[%s242 + $0xb0] sm:$0xf]
        %v413 = vld [vmem:[%s242 + $0xb4] sm:$0xff]
        %v414 = vld [vmem:[%s242 + $0xbc] sm:$0xff]
        %v415 = vld [vmem:[%s242 + $0xc4] sm:$0xf]
        %v416 = vld [vmem:[%s242 + $0xc8] sm:$0xff]
        %v417 = vld [vmem:[%s242 + $0xd0] sm:$0xff]
        %v418 = vld [vmem:[%s242 + $0xd8] sm:$0xf]
        %v419 = vld [vmem:[%s242 + $0xdc] sm:$0xff]
        %v420 = vld [vmem:[%s242 + $0xe4] sm:$0xff]
        %v421 = vld [vmem:[%s242 + $0xec] sm:$0xf]
        %v422 = vld [vmem:[%s242 + $0xf0] sm:$0xff]
        %v423 = vld [vmem:[%s242 + $0xf8] sm:$0xff]
        %v424 = vld [vmem:[%s242 + $0x100] sm:$0xf]
        %v425 = vld [vmem:[%s242 + $0x104] sm:$0xff]
        %v426 = vld [vmem:[%s242 + $0x10c] sm:$0xff]
        %v427 = vld [vmem:[%s242 + $0x114] sm:$0xf]
        %v428 = vld [vmem:[%s242 + $0x118] sm:$0xff]
        %v429 = vld [vmem:[%s242 + $0x120] sm:$0xff]
        %v430 = vld [vmem:[%s242 + $0x128] sm:$0xf]
        %v431 = vld [vmem:[%s242 + $0x12c] sm:$0xff]
        %v432 = vld [vmem:[%s242 + $0x134] sm:$0xff]
        %v433 = vld [vmem:[%s242 + $0x13c] sm:$0xf]
        %v434 = vld [vmem:[%s242 + $0x140] sm:$0xff]
        %v435 = vld [vmem:[%s242 + $0x148] sm:$0xff]
        %v436 = vld [vmem:[%s242 + $0x150] sm:$0xf]
        %v437 = vld [vmem:[%s242 + $0x154] sm:$0xff]
        %v438 = vld [vmem:[%s242 + $0x15c] sm:$0xff]
        %v439 = vld [vmem:[%s242 + $0x164] sm:$0xf]
        %v440 = vld [vmem:[%s242 + $0x168] sm:$0xff]
        %v441 = vld [vmem:[%s242 + $0x170] sm:$0xff]
        %v442 = vld [vmem:[%s242 + $0x178] sm:$0xf]
        %v443 = vld [vmem:[%s242 + $0x17c] sm:$0xff]
        %v444 = vld [vmem:[%s242 + $0x184] sm:$0xff]
        %v445 = vld [vmem:[%s242 + $0x18c] sm:$0xf]
        %v446 = vld [vmem:[%s242 + $0x190] sm:$0xff]
        %v447 = vld [vmem:[%s242 + $0x198] sm:$0xff]
        %v448 = vld [vmem:[%s242 + $0x1a0] sm:$0xf]
        %v449 = vld [vmem:[%s242 + $0x1a4] sm:$0xff]
        %v450 = vld [vmem:[%s242 + $0x1ac] sm:$0xff]
        %v451 = vld [vmem:[%s242 + $0x1b4] sm:$0xf]
        %v452 = vld [vmem:[%s242 + $0x1b8] sm:$0xff]
        %v453 = vld [vmem:[%s242 + $0x1c0] sm:$0xff]
        %v454 = vld [vmem:[%s242 + $0x1c8] sm:$0xf]
        %v455 = vld [vmem:[%s242 + $0x1cc] sm:$0xff]
        %v456 = vld [vmem:[%s242 + $0x1d4] sm:$0xff]
        %v457 = vld [vmem:[%s242 + $0x1dc] sm:$0xf]
        %v458 = vld [vmem:[%s242 + $0x1e0] sm:$0xff]
        %v459 = vld [vmem:[%s242 + $0x1e8] sm:$0xff]
        %v460 = vld [vmem:[%s242 + $0x1f0] sm:$0xf]
        %v461 = vld [vmem:[%s242 + $0x1f4] sm:$0xff]
        %v462 = vld [vmem:[%s242 + $0x1fc] sm:$0xff]
        %v463 = vld [vmem:[%s242 + $0x204] sm:$0xf]
        %v464 = vld [vmem:[%s242 + $0x208] sm:$0xff]
        %v465 = vld [vmem:[%s242 + $0x210] sm:$0xff]
        %v466 = vld [vmem:[%s242 + $0x218] sm:$0xf]
        %v467 = vld [vmem:[%s242 + $0x21c] sm:$0xff]
        %v468 = vld [vmem:[%s242 + $0x224] sm:$0xff]
        %v469 = vld [vmem:[%s242 + $0x22c] sm:$0xf]
        %v470 = vld [vmem:[%s242 + $0x230] sm:$0xff]
        %v471 = vld [vmem:[%s242 + $0x238] sm:$0xff]
        %v472 = vld [vmem:[%s242 + $0x240] sm:$0xf]
        %v473 = vld [vmem:[%s242 + $0x244] sm:$0xff]
        %v474 = vld [vmem:[%s242 + $0x24c] sm:$0xff]
        %v475 = vld [vmem:[%s242 + $0x254] sm:$0xf]
        %v476 = vld [vmem:[%s242 + $0x258] sm:$0xff]
        %v477 = vld [vmem:[%s242 + $0x260] sm:$0xff]
        %v478 = vld [vmem:[%s242 + $0x268] sm:$0xf]
        %v479 = vld [vmem:[%s242 + $0x26c] sm:$0xff]
        %v480 = vld [vmem:[%s242 + $0x274] sm:$0xff]
        %v481 = vld [vmem:[%s242 + $0x27c] sm:$0xf]
        %v482 = vld [vmem:[%s242 + $0x280] sm:$0xff]
        %v483 = vld [vmem:[%s242 + $0x288] sm:$0xff]
        %v484 = vld [vmem:[%s242 + $0x290] sm:$0xf]
        %v485 = vld [vmem:[%s242 + $0x294] sm:$0xff]
        %v486 = vld [vmem:[%s242 + $0x29c] sm:$0xff]
        %v487 = vld [vmem:[%s242 + $0x2a4] sm:$0xf]
        %v488 = vld [vmem:[%s242 + $0x2a8] sm:$0xff]
        %v489 = vld [vmem:[%s242 + $0x2b0] sm:$0xff]
        %v490 = vld [vmem:[%s242 + $0x2b8] sm:$0xf]
        %v491 = vld [vmem:[%s242 + $0x2bc] sm:$0xff]
        %v492 = vld [vmem:[%s242 + $0x2c4] sm:$0xff]
        %v493 = vld [vmem:[%s242 + $0x2cc] sm:$0xf]
        %v494 = vld [vmem:[%s242 + $0x2d0] sm:$0xff]
        %v495 = vld [vmem:[%s242 + $0x2d8] sm:$0xff]
        %v496 = vld [vmem:[%s242 + $0x2e0] sm:$0xf]
        %v497 = vld [vmem:[%s242 + $0x2e4] sm:$0xff]
        %v498 = vld [vmem:[%s242 + $0x2ec] sm:$0xff]
        %v499 = vld [vmem:[%s242 + $0x2f4] sm:$0xf]
        %v500 = vld [vmem:[%s242 + $0x2f8] sm:$0xff]
        %v501 = vld [vmem:[%s242 + $0x300] sm:$0xff]
        %v502 = vld [vmem:[%s242 + $0x308] sm:$0xf]
        %v503 = vld [vmem:[%s242 + $0x30c] sm:$0xff]
        %v504 = vld [vmem:[%s242 + $0x314] sm:$0xff]
        %v505 = vld [vmem:[%s242 + $0x31c] sm:$0xf]
        %v506 = vld [vmem:[%s242 + $0x320] sm:$0xff]
        %v507 = vld [vmem:[%s242 + $0x328] sm:$0xff]
        %v508 = vld [vmem:[%s242 + $0x330] sm:$0xf]
        %v509 = vld [vmem:[%s242 + $0x334] sm:$0xff]
        %v510 = vld [vmem:[%s242 + $0x33c] sm:$0xff]
        %v511 = vld [vmem:[%s242 + $0x344] sm:$0xf]
        %v512 = vld [vmem:[%s242 + $0x348] sm:$0xff]
        %v513 = vld [vmem:[%s242 + $0x350] sm:$0xff]
        %v514 = vld [vmem:[%s242 + $0x358] sm:$0xf]
        %v515 = vld [vmem:[%s242 + $0x35c] sm:$0xff]
        %v516 = vld [vmem:[%s242 + $0x364] sm:$0xff]
        %v517 = vld [vmem:[%s242 + $0x36c] sm:$0xf]
        %v518 = vld [vmem:[%s242 + $0x370] sm:$0xff]
        %v519 = vld [vmem:[%s242 + $0x378] sm:$0xff]
        %v520 = vld [vmem:[%s242 + $0x380] sm:$0xf]
        %v521 = vld [vmem:[%s242 + $0x384] sm:$0xff]
        %v522 = vld [vmem:[%s242 + $0x38c] sm:$0xff]
        %v523 = vld [vmem:[%s242 + $0x394] sm:$0xf]
        %v524 = vld [vmem:[%s242 + $0x398] sm:$0xff]
        %v525 = vld [vmem:[%s242 + $0x3a0] sm:$0xff]
        %v526 = vld [vmem:[%s242 + $0x3a8] sm:$0xf]
        %v527 = vld [vmem:[%s242 + $0x3ac] sm:$0xff]
        %v528 = vld [vmem:[%s242 + $0x3b4] sm:$0xff]
        %v529 = vld [vmem:[%s242 + $0x3bc] sm:$0xf]
        %v546 = vunpack.c.l.b16 %v370
        %v547 = vunpack.c.h.b16 %v370
        %v548 = vunpack.c.l.b16 %v371
        %v549 = vunpack.c.l.b16 %v372
        %v550 = vunpack.c.h.b16 %v372
        %v551 = vunpack.c.l.b16 %v373
        %v552 = vunpack.c.l.b16 %v374
        %v553 = vunpack.c.h.b16 %v374
        %v554 = vunpack.c.l.b16 %v375
        %v555 = vunpack.c.l.b16 %v376
        %v556 = vunpack.c.h.b16 %v376
        %v557 = vunpack.c.l.b16 %v377
        %v558 = vunpack.c.l.b16 %v378
        %v559 = vunpack.c.h.b16 %v378
        %v560 = vunpack.c.l.b16 %v379
        %v561 = vunpack.c.l.b16 %v380
        %v562 = vunpack.c.h.b16 %v380
        %v563 = vunpack.c.l.b16 %v381
        %v564 = vunpack.c.l.b16 %v382
        %v565 = vunpack.c.h.b16 %v382
        %v566 = vunpack.c.l.b16 %v383
        %v567 = vunpack.c.l.b16 %v384
        %v568 = vunpack.c.h.b16 %v384
        %v569 = vunpack.c.l.b16 %v385
        %v570 = vpack.c.b16 %v549, %v546
        %v571 = vpack.c.b16 %v550, %v547
        %v572 = vpack.c.b16 %v551, %v548
        %v573 = vpack.c.b16 %v555, %v552
        %v574 = vpack.c.b16 %v556, %v553
        %v575 = vpack.c.b16 %v557, %v554
        %v576 = vpack.c.b16 %v561, %v558
        %v577 = vpack.c.b16 %v562, %v559
        %v578 = vpack.c.b16 %v563, %v560
        %v579 = vpack.c.b16 %v567, %v564
        %v580 = vpack.c.b16 %v568, %v565
        %v581 = vpack.c.b16 %v569, %v566
        %v738 = vunpack.c.l.b16 %v386
        %v739 = vunpack.c.h.b16 %v386
        %v740 = vunpack.c.l.b16 %v387
        %v741 = vunpack.c.h.b16 %v387
        %v742 = vunpack.c.l.b16 %v388
        %v743 = vunpack.c.l.b16 %v389
        %v744 = vunpack.c.h.b16 %v389
        %v745 = vunpack.c.l.b16 %v390
        %v746 = vunpack.c.h.b16 %v390
        %v747 = vunpack.c.l.b16 %v391
        %v748 = vunpack.c.l.b16 %v392
        %v749 = vunpack.c.h.b16 %v392
        %v750 = vunpack.c.l.b16 %v393
        %v751 = vunpack.c.h.b16 %v393
        %v752 = vunpack.c.l.b16 %v394
        %v753 = vunpack.c.l.b16 %v395
        %v754 = vunpack.c.h.b16 %v395
        %v755 = vunpack.c.l.b16 %v396
        %v756 = vunpack.c.h.b16 %v396
        %v757 = vunpack.c.l.b16 %v397
        %v758 = vunpack.c.l.b16 %v398
        %v759 = vunpack.c.h.b16 %v398
        %v760 = vunpack.c.l.b16 %v399
        %v761 = vunpack.c.h.b16 %v399
        %v762 = vunpack.c.l.b16 %v400
        %v763 = vunpack.c.l.b16 %v401
        %v764 = vunpack.c.h.b16 %v401
        %v765 = vunpack.c.l.b16 %v402
        %v766 = vunpack.c.h.b16 %v402
        %v767 = vunpack.c.l.b16 %v403
        %v768 = vunpack.c.l.b16 %v404
        %v769 = vunpack.c.h.b16 %v404
        %v770 = vunpack.c.l.b16 %v405
        %v771 = vunpack.c.h.b16 %v405
        %v772 = vunpack.c.l.b16 %v406
        %v773 = vunpack.c.l.b16 %v407
        %v774 = vunpack.c.h.b16 %v407
        %v775 = vunpack.c.l.b16 %v408
        %v776 = vunpack.c.h.b16 %v408
        %v777 = vunpack.c.l.b16 %v409
        %v778 = vunpack.c.l.b16 %v410
        %v779 = vunpack.c.h.b16 %v410
        %v780 = vunpack.c.l.b16 %v411
        %v781 = vunpack.c.h.b16 %v411
        %v782 = vunpack.c.l.b16 %v412
        %v783 = vunpack.c.l.b16 %v413
        %v784 = vunpack.c.h.b16 %v413
        %v785 = vunpack.c.l.b16 %v414
        %v786 = vunpack.c.h.b16 %v414
        %v787 = vunpack.c.l.b16 %v415
        %v788 = vunpack.c.l.b16 %v416
        %v789 = vunpack.c.h.b16 %v416
        %v790 = vunpack.c.l.b16 %v417
        %v791 = vunpack.c.h.b16 %v417
        %v792 = vunpack.c.l.b16 %v418
        %v793 = vunpack.c.l.b16 %v419
        %v794 = vunpack.c.h.b16 %v419
        %v795 = vunpack.c.l.b16 %v420
        %v796 = vunpack.c.h.b16 %v420
        %v797 = vunpack.c.l.b16 %v421
        %v798 = vunpack.c.l.b16 %v422
        %v799 = vunpack.c.h.b16 %v422
        %v800 = vunpack.c.l.b16 %v423
        %v801 = vunpack.c.h.b16 %v423
        %v802 = vunpack.c.l.b16 %v424
        %v803 = vunpack.c.l.b16 %v425
        %v804 = vunpack.c.h.b16 %v425
        %v805 = vunpack.c.l.b16 %v426
        %v806 = vunpack.c.h.b16 %v426
        %v807 = vunpack.c.l.b16 %v427
        %v808 = vunpack.c.l.b16 %v428
        %v809 = vunpack.c.h.b16 %v428
        %v810 = vunpack.c.l.b16 %v429
        %v811 = vunpack.c.h.b16 %v429
        %v812 = vunpack.c.l.b16 %v430
        %v813 = vunpack.c.l.b16 %v431
        %v814 = vunpack.c.h.b16 %v431
        %v815 = vunpack.c.l.b16 %v432
        %v816 = vunpack.c.h.b16 %v432
        %v817 = vunpack.c.l.b16 %v433
        %v818 = vunpack.c.l.b16 %v434
        %v819 = vunpack.c.h.b16 %v434
        %v820 = vunpack.c.l.b16 %v435
        %v821 = vunpack.c.h.b16 %v435
        %v822 = vunpack.c.l.b16 %v436
        %v823 = vunpack.c.l.b16 %v437
        %v824 = vunpack.c.h.b16 %v437
        %v825 = vunpack.c.l.b16 %v438
        %v826 = vunpack.c.h.b16 %v438
        %v827 = vunpack.c.l.b16 %v439
        %v828 = vunpack.c.l.b16 %v440
        %v829 = vunpack.c.h.b16 %v440
        %v830 = vunpack.c.l.b16 %v441
        %v831 = vunpack.c.h.b16 %v441
        %v832 = vunpack.c.l.b16 %v442
        %v833 = vunpack.c.l.b16 %v443
        %v834 = vunpack.c.h.b16 %v443
        %v835 = vunpack.c.l.b16 %v444
        %v836 = vunpack.c.h.b16 %v444
        %v837 = vunpack.c.l.b16 %v445
        %v838 = vunpack.c.l.b16 %v446
        %v839 = vunpack.c.h.b16 %v446
        %v840 = vunpack.c.l.b16 %v447
        %v841 = vunpack.c.h.b16 %v447
        %v842 = vunpack.c.l.b16 %v448
        %v843 = vunpack.c.l.b16 %v449
        %v844 = vunpack.c.h.b16 %v449
        %v845 = vunpack.c.l.b16 %v450
        %v846 = vunpack.c.h.b16 %v450
        %v847 = vunpack.c.l.b16 %v451
        %v848 = vunpack.c.l.b16 %v452
        %v849 = vunpack.c.h.b16 %v452
        %v850 = vunpack.c.l.b16 %v453
        %v851 = vunpack.c.h.b16 %v453
        %v852 = vunpack.c.l.b16 %v454
        %v853 = vunpack.c.l.b16 %v455
        %v854 = vunpack.c.h.b16 %v455
        %v855 = vunpack.c.l.b16 %v456
        %v856 = vunpack.c.h.b16 %v456
        %v857 = vunpack.c.l.b16 %v457
        %v858 = vunpack.c.l.b16 %v458
        %v859 = vunpack.c.h.b16 %v458
        %v860 = vunpack.c.l.b16 %v459
        %v861 = vunpack.c.h.b16 %v459
        %v862 = vunpack.c.l.b16 %v460
        %v863 = vunpack.c.l.b16 %v461
        %v864 = vunpack.c.h.b16 %v461
        %v865 = vunpack.c.l.b16 %v462
        %v866 = vunpack.c.h.b16 %v462
        %v867 = vunpack.c.l.b16 %v463
        %v868 = vunpack.c.l.b16 %v464
        %v869 = vunpack.c.h.b16 %v464
        %v870 = vunpack.c.l.b16 %v465
        %v871 = vunpack.c.h.b16 %v465
        %v872 = vunpack.c.l.b16 %v466
        %v873 = vunpack.c.l.b16 %v467
        %v874 = vunpack.c.h.b16 %v467
        %v875 = vunpack.c.l.b16 %v468
        %v876 = vunpack.c.h.b16 %v468
        %v877 = vunpack.c.l.b16 %v469
        %v878 = vunpack.c.l.b16 %v470
        %v879 = vunpack.c.h.b16 %v470
        %v880 = vunpack.c.l.b16 %v471
        %v881 = vunpack.c.h.b16 %v471
        %v882 = vunpack.c.l.b16 %v472
        %v883 = vunpack.c.l.b16 %v473
        %v884 = vunpack.c.h.b16 %v473
        %v885 = vunpack.c.l.b16 %v474
        %v886 = vunpack.c.h.b16 %v474
        %v887 = vunpack.c.l.b16 %v475
        %v888 = vunpack.c.l.b16 %v476
        %v889 = vunpack.c.h.b16 %v476
        %v890 = vunpack.c.l.b16 %v477
        %v891 = vunpack.c.h.b16 %v477
        %v892 = vunpack.c.l.b16 %v478
        %v893 = vunpack.c.l.b16 %v479
        %v894 = vunpack.c.h.b16 %v479
        %v895 = vunpack.c.l.b16 %v480
        %v896 = vunpack.c.h.b16 %v480
        %v897 = vunpack.c.l.b16 %v481
        %v898 = vunpack.c.l.b16 %v482
        %v899 = vunpack.c.h.b16 %v482
        %v900 = vunpack.c.l.b16 %v483
        %v901 = vunpack.c.h.b16 %v483
        %v902 = vunpack.c.l.b16 %v484
        %v903 = vunpack.c.l.b16 %v485
        %v904 = vunpack.c.h.b16 %v485
        %v905 = vunpack.c.l.b16 %v486
        %v906 = vunpack.c.h.b16 %v486
        %v907 = vunpack.c.l.b16 %v487
        %v908 = vunpack.c.l.b16 %v488
        %v909 = vunpack.c.h.b16 %v488
        %v910 = vunpack.c.l.b16 %v489
        %v911 = vunpack.c.h.b16 %v489
        %v912 = vunpack.c.l.b16 %v490
        %v913 = vunpack.c.l.b16 %v491
        %v914 = vunpack.c.h.b16 %v491
        %v915 = vunpack.c.l.b16 %v492
        %v916 = vunpack.c.h.b16 %v492
        %v917 = vunpack.c.l.b16 %v493
        %v918 = vunpack.c.l.b16 %v494
        %v919 = vunpack.c.h.b16 %v494
        %v920 = vunpack.c.l.b16 %v495
        %v921 = vunpack.c.h.b16 %v495
        %v922 = vunpack.c.l.b16 %v496
        %v923 = vunpack.c.l.b16 %v497
        %v924 = vunpack.c.h.b16 %v497
        %v925 = vunpack.c.l.b16 %v498
        %v926 = vunpack.c.h.b16 %v498
        %v927 = vunpack.c.l.b16 %v499
        %v928 = vunpack.c.l.b16 %v500
        %v929 = vunpack.c.h.b16 %v500
        %v930 = vunpack.c.l.b16 %v501
        %v931 = vunpack.c.h.b16 %v501
        %v932 = vunpack.c.l.b16 %v502
        %v933 = vunpack.c.l.b16 %v503
        %v934 = vunpack.c.h.b16 %v503
        %v935 = vunpack.c.l.b16 %v504
        %v936 = vunpack.c.h.b16 %v504
        %v937 = vunpack.c.l.b16 %v505
        %v938 = vunpack.c.l.b16 %v506
        %v939 = vunpack.c.h.b16 %v506
        %v940 = vunpack.c.l.b16 %v507
        %v941 = vunpack.c.h.b16 %v507
        %v942 = vunpack.c.l.b16 %v508
        %v943 = vunpack.c.l.b16 %v509
        %v944 = vunpack.c.h.b16 %v509
        %v945 = vunpack.c.l.b16 %v510
        %v946 = vunpack.c.h.b16 %v510
        %v947 = vunpack.c.l.b16 %v511
        %v948 = vunpack.c.l.b16 %v512
        %v949 = vunpack.c.h.b16 %v512
        %v950 = vunpack.c.l.b16 %v513
        %v951 = vunpack.c.h.b16 %v513
        %v952 = vunpack.c.l.b16 %v514
        %v953 = vunpack.c.l.b16 %v515
        %v954 = vunpack.c.h.b16 %v515
        %v955 = vunpack.c.l.b16 %v516
        %v956 = vunpack.c.h.b16 %v516
        %v957 = vunpack.c.l.b16 %v517
        %v958 = vunpack.c.l.b16 %v518
        %v959 = vunpack.c.h.b16 %v518
        %v960 = vunpack.c.l.b16 %v519
        %v961 = vunpack.c.h.b16 %v519
        %v962 = vunpack.c.l.b16 %v520
        %v963 = vunpack.c.l.b16 %v521
        %v964 = vunpack.c.h.b16 %v521
        %v965 = vunpack.c.l.b16 %v522
        %v966 = vunpack.c.h.b16 %v522
        %v967 = vunpack.c.l.b16 %v523
        %v968 = vunpack.c.l.b16 %v524
        %v969 = vunpack.c.h.b16 %v524
        %v970 = vunpack.c.l.b16 %v525
        %v971 = vunpack.c.h.b16 %v525
        %v972 = vunpack.c.l.b16 %v526
        %v973 = vunpack.c.l.b16 %v527
        %v974 = vunpack.c.h.b16 %v527
        %v975 = vunpack.c.l.b16 %v528
        %v976 = vunpack.c.h.b16 %v528
        %v977 = vunpack.c.l.b16 %v529
        %v978 = vpack.c.b16 %v743, %v738
        %v979 = vpack.c.b16 %v744, %v739
        %v980 = vpack.c.b16 %v745, %v740
        %v981 = vpack.c.b16 %v746, %v741
        %v982 = vpack.c.b16 %v747, %v742
        %v983 = vpack.c.b16 %v753, %v748
        %v984 = vpack.c.b16 %v754, %v749
        %v985 = vpack.c.b16 %v755, %v750
        %v986 = vpack.c.b16 %v756, %v751
        %v987 = vpack.c.b16 %v757, %v752
        %v988 = vpack.c.b16 %v763, %v758
        %v989 = vpack.c.b16 %v764, %v759
        %v990 = vpack.c.b16 %v765, %v760
        %v991 = vpack.c.b16 %v766, %v761
        %v992 = vpack.c.b16 %v767, %v762
        %v993 = vpack.c.b16 %v773, %v768
        %v994 = vpack.c.b16 %v774, %v769
        %v995 = vpack.c.b16 %v775, %v770
        %v996 = vpack.c.b16 %v776, %v771
        %v997 = vpack.c.b16 %v777, %v772
        %v998 = vpack.c.b16 %v783, %v778
        %v999 = vpack.c.b16 %v784, %v779
        %v1000 = vpack.c.b16 %v785, %v780
        %v1001 = vpack.c.b16 %v786, %v781
        %v1002 = vpack.c.b16 %v787, %v782
        %v1003 = vpack.c.b16 %v793, %v788
        %v1004 = vpack.c.b16 %v794, %v789
        %v1005 = vpack.c.b16 %v795, %v790
        %v1006 = vpack.c.b16 %v796, %v791
        %v1007 = vpack.c.b16 %v797, %v792
        %v1008 = vpack.c.b16 %v803, %v798
        %v1009 = vpack.c.b16 %v804, %v799
        %v1010 = vpack.c.b16 %v805, %v800
        %v1011 = vpack.c.b16 %v806, %v801
        %v1012 = vpack.c.b16 %v807, %v802
        %v1013 = vpack.c.b16 %v813, %v808
        %v1014 = vpack.c.b16 %v814, %v809
        %v1015 = vpack.c.b16 %v815, %v810
        %v1016 = vpack.c.b16 %v816, %v811
        %v1017 = vpack.c.b16 %v817, %v812
        %v1018 = vpack.c.b16 %v823, %v818
        %v1019 = vpack.c.b16 %v824, %v819
        %v1020 = vpack.c.b16 %v825, %v820
        %v1021 = vpack.c.b16 %v826, %v821
        %v1022 = vpack.c.b16 %v827, %v822
        %v1023 = vpack.c.b16 %v833, %v828
        %v1024 = vpack.c.b16 %v834, %v829
        %v1025 = vpack.c.b16 %v835, %v830
        %v1026 = vpack.c.b16 %v836, %v831
        %v1027 = vpack.c.b16 %v837, %v832
        %v1028 = vpack.c.b16 %v843, %v838
        %v1029 = vpack.c.b16 %v844, %v839
        %v1030 = vpack.c.b16 %v845, %v840
        %v1031 = vpack.c.b16 %v846, %v841
        %v1032 = vpack.c.b16 %v847, %v842
        %v1033 = vpack.c.b16 %v853, %v848
        %v1034 = vpack.c.b16 %v854, %v849
        %v1035 = vpack.c.b16 %v855, %v850
        %v1036 = vpack.c.b16 %v856, %v851
        %v1037 = vpack.c.b16 %v857, %v852
        %v1038 = vpack.c.b16 %v863, %v858
        %v1039 = vpack.c.b16 %v864, %v859
        %v1040 = vpack.c.b16 %v865, %v860
        %v1041 = vpack.c.b16 %v866, %v861
        %v1042 = vpack.c.b16 %v867, %v862
        %v1043 = vpack.c.b16 %v873, %v868
        %v1044 = vpack.c.b16 %v874, %v869
        %v1045 = vpack.c.b16 %v875, %v870
        %v1046 = vpack.c.b16 %v876, %v871
        %v1047 = vpack.c.b16 %v877, %v872
        %v1048 = vpack.c.b16 %v883, %v878
        %v1049 = vpack.c.b16 %v884, %v879
        %v1050 = vpack.c.b16 %v885, %v880
        %v1051 = vpack.c.b16 %v886, %v881
        %v1052 = vpack.c.b16 %v887, %v882
        %v1053 = vpack.c.b16 %v893, %v888
        %v1054 = vpack.c.b16 %v894, %v889
        %v1055 = vpack.c.b16 %v895, %v890
        %v1056 = vpack.c.b16 %v896, %v891
        %v1057 = vpack.c.b16 %v897, %v892
        %v1058 = vpack.c.b16 %v903, %v898
        %v1059 = vpack.c.b16 %v904, %v899
        %v1060 = vpack.c.b16 %v905, %v900
        %v1061 = vpack.c.b16 %v906, %v901
        %v1062 = vpack.c.b16 %v907, %v902
        %v1063 = vpack.c.b16 %v913, %v908
        %v1064 = vpack.c.b16 %v914, %v909
        %v1065 = vpack.c.b16 %v915, %v910
        %v1066 = vpack.c.b16 %v916, %v911
        %v1067 = vpack.c.b16 %v917, %v912
        %v1068 = vpack.c.b16 %v923, %v918
        %v1069 = vpack.c.b16 %v924, %v919
        %v1070 = vpack.c.b16 %v925, %v920
        %v1071 = vpack.c.b16 %v926, %v921
        %v1072 = vpack.c.b16 %v927, %v922
        %v1073 = vpack.c.b16 %v933, %v928
        %v1074 = vpack.c.b16 %v934, %v929
        %v1075 = vpack.c.b16 %v935, %v930
        %v1076 = vpack.c.b16 %v936, %v931
        %v1077 = vpack.c.b16 %v937, %v932
        %v1078 = vpack.c.b16 %v943, %v938
        %v1079 = vpack.c.b16 %v944, %v939
        %v1080 = vpack.c.b16 %v945, %v940
        %v1081 = vpack.c.b16 %v946, %v941
        %v1082 = vpack.c.b16 %v947, %v942
        %v1083 = vpack.c.b16 %v953, %v948
        %v1084 = vpack.c.b16 %v954, %v949
        %v1085 = vpack.c.b16 %v955, %v950
        %v1086 = vpack.c.b16 %v956, %v951
        %v1087 = vpack.c.b16 %v957, %v952
        %v1088 = vpack.c.b16 %v963, %v958
        %v1089 = vpack.c.b16 %v964, %v959
        %v1090 = vpack.c.b16 %v965, %v960
        %v1091 = vpack.c.b16 %v966, %v961
        %v1092 = vpack.c.b16 %v967, %v962
        %v1093 = vpack.c.b16 %v973, %v968
        %v1094 = vpack.c.b16 %v974, %v969
        %v1095 = vpack.c.b16 %v975, %v970
        %v1096 = vpack.c.b16 %v976, %v971
        %v1097 = vpack.c.b16 %v977, %v972
        %1218 = vmatprep.subr.bf16.mxu0 %v979
        %1219 = vmatpush1.bf16.msra.mxu0 %v978
        %1220 = vmatprep.subr.bf16.mxu0 %v984
        %1221 = vmatpush1.bf16.msra.mxu0 %v983
        %1222 = vmatprep.subr.bf16.mxu0 %v989
        %1223 = vmatpush1.bf16.msra.mxu0 %v988
        %1224 = vmatprep.subr.bf16.mxu0 %v994
        %1225 = vmatpush1.bf16.msra.mxu0 %v993
        %1226 = vmatprep.subr.bf16.mxu0 %v999
        %1227 = vmatpush1.bf16.msra.mxu0 %v998
        %1228 = vmatprep.subr.bf16.mxu0 %v1004
        %1229 = vmatpush1.bf16.msra.mxu0 %v1003
        %1230 = vmatprep.subr.bf16.mxu0 %v1009
        %1231 = vmatpush1.bf16.msra.mxu0 %v1008
        %1232 = vmatprep.subr.bf16.mxu0 %v1014
        %1233 = vmatpush1.bf16.msra.mxu0 %v1013
        %1234 = vmatprep.subr.bf16.mxu0 %v1019
        %1235 = vmatpush1.bf16.msra.mxu0 %v1018
        %1236 = vmatprep.subr.bf16.mxu0 %v1024
        %1237 = vmatpush1.bf16.msra.mxu0 %v1023
        %1238 = vmatprep.subr.bf16.mxu0 %v1029
        %1239 = vmatpush1.bf16.msra.mxu0 %v1028
        %1240 = vmatprep.subr.bf16.mxu0 %v1034
        %1241 = vmatpush1.bf16.msra.mxu0 %v1033
        %1242 = vmatprep.subr.bf16.mxu0 %v1039
        %1243 = vmatpush1.bf16.msra.mxu0 %v1038
        %1244 = vmatprep.subr.bf16.mxu0 %v1044
        %1245 = vmatpush1.bf16.msra.mxu0 %v1043
        %1246 = vmatprep.subr.bf16.mxu0 %v1049
        %1247 = vmatpush1.bf16.msra.mxu0 %v1048
        %1248 = vmatprep.subr.bf16.mxu0 %v1054
        %1249 = vmatpush1.bf16.msra.mxu0 %v1053
        %1250 = vmatprep.mubr.bf16.mxu0 %v571
        %1251 = vmatmul.mubr.bf16.gmra.mrb[0].mxu0 %v570
        %v1252 = vpop.f32.mrb[0].mxu0
        %v1253 = vadd.f32 0.0, %v1252
        %v1254 = vpop.f32.mrb[0].mxu0
        %v1255 = vadd.f32 0.0, %v1254
        %v1256 = vpop.f32.mrb[0].mxu0
        %v1257 = vadd.f32 0.0, %v1256
        %v1258 = vpop.f32.mrb[0].mxu0
        %v1259 = vadd.f32 0.0, %v1258
        %1260 = vmatprep.mubr.bf16.mxu0 %v574
        %1261 = vmatmul.mubr.bf16.gmra.mrb[0].mxu0 %v573
        %v1262 = vpop.f32.mrb[0].mxu0
        %v1263 = vadd.f32 0.0, %v1262
        %v1264 = vpop.f32.mrb[0].mxu0
        %v1265 = vadd.f32 0.0, %v1264
        %v1266 = vpop.f32.mrb[0].mxu0
        %v1267 = vadd.f32 0.0, %v1266
        %v1268 = vpop.f32.mrb[0].mxu0
        %v1269 = vadd.f32 0.0, %v1268
        %1270 = vmatprep.mubr.bf16.mxu0 %v577
        %1271 = vmatmul.mubr.bf16.gmra.mrb[0].mxu0 %v576
        %v1272 = vpop.f32.mrb[0].mxu0
        %v1273 = vadd.f32 0.0, %v1272
        %v1274 = vpop.f32.mrb[0].mxu0
        %v1275 = vadd.f32 0.0, %v1274
        %v1276 = vpop.f32.mrb[0].mxu0
        %v1277 = vadd.f32 0.0, %v1276
        %v1278 = vpop.f32.mrb[0].mxu0
        %v1279 = vadd.f32 0.0, %v1278
        %1280 = vmatprep.mubr.bf16.mxu0 %v580
        %1281 = vmatmul.mubr.bf16.gmra.mrb[0].mxu0 %v579
        %v1282 = vpop.f32.mrb[0].mxu0
        %v1283 = vadd.f32 0.0, %v1282
        %v1284 = vpop.f32.mrb[0].mxu0
        %v1285 = vadd.f32 0.0, %v1284
        %v1286 = vpop.f32.mrb[0].mxu0
        %v1287 = vadd.f32 0.0, %v1286
        %v1288 = vpop.f32.mrb[0].mxu0
        %v1289 = vadd.f32 0.0, %v1288
        %1290 = vdwg.mxu0
        %1291 = vmatprep.subr.bf16.mxu0 %v1059
        %1292 = vmatpush1.bf16.msra.mxu0 %v1058
        %1293 = vmatprep.subr.bf16.mxu0 %v1064
        %1294 = vmatpush1.bf16.msra.mxu0 %v1063
        %1295 = vmatprep.subr.bf16.mxu0 %v1069
        %1296 = vmatpush1.bf16.msra.mxu0 %v1068
        %1297 = vmatprep.subr.bf16.mxu0 %v1074
        %1298 = vmatpush1.bf16.msra.mxu0 %v1073
        %1299 = vmatprep.subr.bf16.mxu0 %v1079
        %1300 = vmatpush1.bf16.msra.mxu0 %v1078
        %1301 = vmatprep.subr.bf16.mxu0 %v1084
        %1302 = vmatpush1.bf16.msra.mxu0 %v1083
        %1303 = vmatprep.subr.bf16.mxu0 %v1089
        %1304 = vmatpush1.bf16.msra.mxu0 %v1088
        %1305 = vmatprep.subr.bf16.mxu0 %v1094
        %1306 = vmatpush1.bf16.msra.mxu0 %v1093
        %1307 = vmatprep.subr.bf16.mxu0 0
        %1308 = vmatpush1.bf16.msra.mxu0 0
        %1309 = vmatprep.subr.bf16.mxu0 0
        %1310 = vmatpush1.bf16.msra.mxu0 0
        %1311 = vmatprep.subr.bf16.mxu0 0
        %1312 = vmatpush1.bf16.msra.mxu0 0
        %1313 = vmatprep.subr.bf16.mxu0 0
        %1314 = vmatpush1.bf16.msra.mxu0 0
        %1315 = vmatprep.subr.bf16.mxu0 0
        %1316 = vmatpush1.bf16.msra.mxu0 0
        %1317 = vmatprep.subr.bf16.mxu0 0
        %1318 = vmatpush1.bf16.msra.mxu0 0
        %1319 = vmatprep.subr.bf16.mxu0 0
        %1320 = vmatpush1.bf16.msra.mxu0 0
        %1321 = vmatprep.subr.bf16.mxu0 0
        %1322 = vmatpush1.bf16.msra.mxu0 0
        %1323 = vmatprep.mubr.bf16.mxu0 0
        %1324 = vmatmul.mubr.bf16.gmra.mrb[0].mxu0 %v572
        %v1325 = vpop.f32.mrb[0].mxu0
        %v1326 = vadd.f32 %v1253, %v1325
        %v1327 = vpop.f32.mrb[0].mxu0
        %v1328 = vadd.f32 %v1255, %v1327
        %v1329 = vpop.f32.mrb[0].mxu0
        %v1330 = vadd.f32 %v1257, %v1329
        %v1331 = vpop.f32.mrb[0].mxu0
        %v1332 = vadd.f32 %v1259, %v1331
        %1333 = vmatprep.mubr.bf16.mxu0 0
        %1334 = vmatmul.mubr.bf16.gmra.mrb[0].mxu0 %v575
        %v1335 = vpop.f32.mrb[0].mxu0
        %v1336 = vadd.f32 %v1263, %v1335
        %v1337 = vpop.f32.mrb[0].mxu0
        %v1338 = vadd.f32 %v1265, %v1337
        %v1339 = vpop.f32.mrb[0].mxu0
        %v1340 = vadd.f32 %v1267, %v1339
        %v1341 = vpop.f32.mrb[0].mxu0
        %v1342 = vadd.f32 %v1269, %v1341
        %1343 = vmatprep.mubr.bf16.mxu0 0
        %1344 = vmatmul.mubr.bf16.gmra.mrb[0].mxu0 %v578
        %v1345 = vpop.f32.mrb[0].mxu0
        %v1346 = vadd.f32 %v1273, %v1345
        %v1347 = vpop.f32.mrb[0].mxu0
        %v1348 = vadd.f32 %v1275, %v1347
        %v1349 = vpop.f32.mrb[0].mxu0
        %v1350 = vadd.f32 %v1277, %v1349
        %v1351 = vpop.f32.mrb[0].mxu0
        %v1352 = vadd.f32 %v1279, %v1351
        %1353 = vmatprep.mubr.bf16.mxu0 0
        %1354 = vmatmul.mubr.bf16.gmra.mrb[0].mxu0 %v581
        %v1355 = vpop.f32.mrb[0].mxu0
        %v1356 = vadd.f32 %v1283, %v1355
        %v1357 = vpop.f32.mrb[0].mxu0
        %v1358 = vadd.f32 %v1285, %v1357
        %v1359 = vpop.f32.mrb[0].mxu0
        %v1360 = vadd.f32 %v1287, %v1359
        %v1361 = vpop.f32.mrb[0].mxu0
        %v1362 = vadd.f32 %v1289, %v1361
        %1363 = vdwg.mxu0
        %1364 = vmatprep.subr.bf16.mxu0 %v981
        %1365 = vmatpush1.bf16.msra.mxu0 %v980
        %1366 = vmatprep.subr.bf16.mxu0 %v986
        %1367 = vmatpush1.bf16.msra.mxu0 %v985
        %1368 = vmatprep.subr.bf16.mxu0 %v991
        %1369 = vmatpush1.bf16.msra.mxu0 %v990
        %1370 = vmatprep.subr.bf16.mxu0 %v996
        %1371 = vmatpush1.bf16.msra.mxu0 %v995
        %1372 = vmatprep.subr.bf16.mxu0 %v1001
        %1373 = vmatpush1.bf16.msra.mxu0 %v1000
        %1374 = vmatprep.subr.bf16.mxu0 %v1006
        %1375 = vmatpush1.bf16.msra.mxu0 %v1005
        %1376 = vmatprep.subr.bf16.mxu0 %v1011
        %1377 = vmatpush1.bf16.msra.mxu0 %v1010
        %1378 = vmatprep.subr.bf16.mxu0 %v1016
        %1379 = vmatpush1.bf16.msra.mxu0 %v1015
        %1380 = vmatprep.subr.bf16.mxu0 %v1021
        %1381 = vmatpush1.bf16.msra.mxu0 %v1020
        %1382 = vmatprep.subr.bf16.mxu0 %v1026
        %1383 = vmatpush1.bf16.msra.mxu0 %v1025
        %1384 = vmatprep.subr.bf16.mxu0 %v1031
        %1385 = vmatpush1.bf16.msra.mxu0 %v1030
        %1386 = vmatprep.subr.bf16.mxu0 %v1036
        %1387 = vmatpush1.bf16.msra.mxu0 %v1035
        %1388 = vmatprep.subr.bf16.mxu0 %v1041
        %1389 = vmatpush1.bf16.msra.mxu0 %v1040
        %1390 = vmatprep.subr.bf16.mxu0 %v1046
        %1391 = vmatpush1.bf16.msra.mxu0 %v1045
        %1392 = vmatprep.subr.bf16.mxu0 %v1051
        %1393 = vmatpush1.bf16.msra.mxu0 %v1050
        %1394 = vmatprep.subr.bf16.mxu0 %v1056
        %1395 = vmatpush1.bf16.msra.mxu0 %v1055
        %1396 = vmatprep.mubr.bf16.mxu0 %v571
        %1397 = vmatmul.mubr.bf16.gmra.mrb[0].mxu0 %v570
        %v1398 = vpop.f32.mrb[0].mxu0
        %v1399 = vadd.f32 0.0, %v1398
        %v1400 = vpop.f32.mrb[0].mxu0
        %v1401 = vadd.f32 0.0, %v1400
        %v1402 = vpop.f32.mrb[0].mxu0
        %v1403 = vadd.f32 0.0, %v1402
        %v1404 = vpop.f32.mrb[0].mxu0
        %v1405 = vadd.f32 0.0, %v1404
        %1406 = vmatprep.mubr.bf16.mxu0 %v574
        %1407 = vmatmul.mubr.bf16.gmra.mrb[0].mxu0 %v573
        %v1408 = vpop.f32.mrb[0].mxu0
        %v1409 = vadd.f32 0.0, %v1408
        %v1410 = vpop.f32.mrb[0].mxu0
        %v1411 = vadd.f32 0.0, %v1410
        %v1412 = vpop.f32.mrb[0].mxu0
        %v1413 = vadd.f32 0.0, %v1412
        %v1414 = vpop.f32.mrb[0].mxu0
        %v1415 = vadd.f32 0.0, %v1414
        %1416 = vmatprep.mubr.bf16.mxu0 %v577
        %1417 = vmatmul.mubr.bf16.gmra.mrb[0].mxu0 %v576
        %v1418 = vpop.f32.mrb[0].mxu0
        %v1419 = vadd.f32 0.0, %v1418
        %v1420 = vpop.f32.mrb[0].mxu0
        %v1421 = vadd.f32 0.0, %v1420
        %v1422 = vpop.f32.mrb[0].mxu0
        %v1423 = vadd.f32 0.0, %v1422
        %v1424 = vpop.f32.mrb[0].mxu0
        %v1425 = vadd.f32 0.0, %v1424
        %1426 = vmatprep.mubr.bf16.mxu0 %v580
        %1427 = vmatmul.mubr.bf16.gmra.mrb[0].mxu0 %v579
        %v1428 = vpop.f32.mrb[0].mxu0
        %v1429 = vadd.f32 0.0, %v1428
        %v1430 = vpop.f32.mrb[0].mxu0
        %v1431 = vadd.f32 0.0, %v1430
        %v1432 = vpop.f32.mrb[0].mxu0
        %v1433 = vadd.f32 0.0, %v1432
        %v1434 = vpop.f32.mrb[0].mxu0
        %v1435 = vadd.f32 0.0, %v1434
        %1436 = vdwg.mxu0
        %1437 = vmatprep.subr.bf16.mxu0 %v1061
        %1438 = vmatpush1.bf16.msra.mxu0 %v1060
        %1439 = vmatprep.subr.bf16.mxu0 %v1066
        %1440 = vmatpush1.bf16.msra.mxu0 %v1065
        %1441 = vmatprep.subr.bf16.mxu0 %v1071
        %1442 = vmatpush1.bf16.msra.mxu0 %v1070
        %1443 = vmatprep.subr.bf16.mxu0 %v1076
        %1444 = vmatpush1.bf16.msra.mxu0 %v1075
        %1445 = vmatprep.subr.bf16.mxu0 %v1081
        %1446 = vmatpush1.bf16.msra.mxu0 %v1080
        %1447 = vmatprep.subr.bf16.mxu0 %v1086
        %1448 = vmatpush1.bf16.msra.mxu0 %v1085
        %1449 = vmatprep.subr.bf16.mxu0 %v1091
        %1450 = vmatpush1.bf16.msra.mxu0 %v1090
        %1451 = vmatprep.subr.bf16.mxu0 %v1096
        %1452 = vmatpush1.bf16.msra.mxu0 %v1095
        %1453 = vmatprep.subr.bf16.mxu0 0
        %1454 = vmatpush1.bf16.msra.mxu0 0
        %1455 = vmatprep.subr.bf16.mxu0 0
        %1456 = vmatpush1.bf16.msra.mxu0 0
        %1457 = vmatprep.subr.bf16.mxu0 0
        %1458 = vmatpush1.bf16.msra.mxu0 0
        %1459 = vmatprep.subr.bf16.mxu0 0
        %1460 = vmatpush1.bf16.msra.mxu0 0
        %1461 = vmatprep.subr.bf16.mxu0 0
        %1462 = vmatpush1.bf16.msra.mxu0 0
        %1463 = vmatprep.subr.bf16.mxu0 0
        %1464 = vmatpush1.bf16.msra.mxu0 0
        %1465 = vmatprep.subr.bf16.mxu0 0
        %1466 = vmatpush1.bf16.msra.mxu0 0
        %1467 = vmatprep.subr.bf16.mxu0 0
        %1468 = vmatpush1.bf16.msra.mxu0 0
        %1469 = vmatprep.mubr.bf16.mxu0 0
        %1470 = vmatmul.mubr.bf16.gmra.mrb[0].mxu0 %v572
        %v1471 = vpop.f32.mrb[0].mxu0
        %v1472 = vadd.f32 %v1399, %v1471
        %v1473 = vpop.f32.mrb[0].mxu0
        %v1474 = vadd.f32 %v1401, %v1473
        %v1475 = vpop.f32.mrb[0].mxu0
        %v1476 = vadd.f32 %v1403, %v1475
        %v1477 = vpop.f32.mrb[0].mxu0
        %v1478 = vadd.f32 %v1405, %v1477
        %1479 = vmatprep.mubr.bf16.mxu0 0
        %1480 = vmatmul.mubr.bf16.gmra.mrb[0].mxu0 %v575
        %v1481 = vpop.f32.mrb[0].mxu0
        %v1482 = vadd.f32 %v1409, %v1481
        %v1483 = vpop.f32.mrb[0].mxu0
        %v1484 = vadd.f32 %v1411, %v1483
        %v1485 = vpop.f32.mrb[0].mxu0
        %v1486 = vadd.f32 %v1413, %v1485
        %v1487 = vpop.f32.mrb[0].mxu0
        %v1488 = vadd.f32 %v1415, %v1487
        %1489 = vmatprep.mubr.bf16.mxu0 0
        %1490 = vmatmul.mubr.bf16.gmra.mrb[0].mxu0 %v578
        %v1491 = vpop.f32.mrb[0].mxu0
        %v1492 = vadd.f32 %v1419, %v1491
        %v1493 = vpop.f32.mrb[0].mxu0
        %v1494 = vadd.f32 %v1421, %v1493
        %v1495 = vpop.f32.mrb[0].mxu0
        %v1496 = vadd.f32 %v1423, %v1495
        %v1497 = vpop.f32.mrb[0].mxu0
        %v1498 = vadd.f32 %v1425, %v1497
        %1499 = vmatprep.mubr.bf16.mxu0 0
        %1500 = vmatmul.mubr.bf16.gmra.mrb[0].mxu0 %v581
        %v1501 = vpop.f32.mrb[0].mxu0
        %v1502 = vadd.f32 %v1429, %v1501
        %v1503 = vpop.f32.mrb[0].mxu0
        %v1504 = vadd.f32 %v1431, %v1503
        %v1505 = vpop.f32.mrb[0].mxu0
        %v1506 = vadd.f32 %v1433, %v1505
        %v1507 = vpop.f32.mrb[0].mxu0
        %v1508 = vadd.f32 %v1435, %v1507
        %1509 = vdwg.mxu0
        %1510 = vmatprep.subr.bf16.mxu0 0
        %1511 = vmatpush1.bf16.msra.mxu0 %v982
        %1512 = vmatprep.subr.bf16.mxu0 0
        %1513 = vmatpush1.bf16.msra.mxu0 %v987
        %1514 = vmatprep.subr.bf16.mxu0 0
        %1515 = vmatpush1.bf16.msra.mxu0 %v992
        %1516 = vmatprep.subr.bf16.mxu0 0
        %1517 = vmatpush1.bf16.msra.mxu0 %v997
        %1518 = vmatprep.subr.bf16.mxu0 0
        %1519 = vmatpush1.bf16.msra.mxu0 %v1002
        %1520 = vmatprep.subr.bf16.mxu0 0
        %1521 = vmatpush1.bf16.msra.mxu0 %v1007
        %1522 = vmatprep.subr.bf16.mxu0 0
        %1523 = vmatpush1.bf16.msra.mxu0 %v1012
        %1524 = vmatprep.subr.bf16.mxu0 0
        %1525 = vmatpush1.bf16.msra.mxu0 %v1017
        %1526 = vmatprep.subr.bf16.mxu0 0
        %1527 = vmatpush1.bf16.msra.mxu0 %v1022
        %1528 = vmatprep.subr.bf16.mxu0 0
        %1529 = vmatpush1.bf16.msra.mxu0 %v1027
        %1530 = vmatprep.subr.bf16.mxu0 0
        %1531 = vmatpush1.bf16.msra.mxu0 %v1032
        %1532 = vmatprep.subr.bf16.mxu0 0
        %1533 = vmatpush1.bf16.msra.mxu0 %v1037
        %1534 = vmatprep.subr.bf16.mxu0 0
        %1535 = vmatpush1.bf16.msra.mxu0 %v1042
        %1536 = vmatprep.subr.bf16.mxu0 0
        %1537 = vmatpush1.bf16.msra.mxu0 %v1047
        %1538 = vmatprep.subr.bf16.mxu0 0
        %1539 = vmatpush1.bf16.msra.mxu0 %v1052
        %1540 = vmatprep.subr.bf16.mxu0 0
        %1541 = vmatpush1.bf16.msra.mxu0 %v1057
        %1542 = vmatprep.mubr.bf16.mxu0 %v571
        %1543 = vmatmul.mubr.bf16.gmra.mrb[0].mxu0 %v570
        %v1544 = vpop.f32.mrb[0].mxu0
        %v1545 = vadd.f32 0.0, %v1544
        %v1546 = vpop.f32.mrb[0].mxu0
        %v1547 = vpop.f32.mrb[0].mxu0
        %v1548 = vadd.f32 0.0, %v1547
        %v1549 = vpop.f32.mrb[0].mxu0
        %1550 = vmatprep.mubr.bf16.mxu0 %v574
        %1551 = vmatmul.mubr.bf16.gmra.mrb[0].mxu0 %v573
        %v1552 = vpop.f32.mrb[0].mxu0
        %v1553 = vadd.f32 0.0, %v1552
        %v1554 = vpop.f32.mrb[0].mxu0
        %v1555 = vpop.f32.mrb[0].mxu0
        %v1556 = vadd.f32 0.0, %v1555
        %v1557 = vpop.f32.mrb[0].mxu0
        %1558 = vmatprep.mubr.bf16.mxu0 %v577
        %1559 = vmatmul.mubr.bf16.gmra.mrb[0].mxu0 %v576
        %v1560 = vpop.f32.mrb[0].mxu0
        %v1561 = vadd.f32 0.0, %v1560
        %v1562 = vpop.f32.mrb[0].mxu0
        %v1563 = vpop.f32.mrb[0].mxu0
        %v1564 = vadd.f32 0.0, %v1563
        %v1565 = vpop.f32.mrb[0].mxu0
        %1566 = vmatprep.mubr.bf16.mxu0 %v580
        %1567 = vmatmul.mubr.bf16.gmra.mrb[0].mxu0 %v579
        %v1568 = vpop.f32.mrb[0].mxu0
        %v1569 = vadd.f32 0.0, %v1568
        %v1570 = vpop.f32.mrb[0].mxu0
        %v1571 = vpop.f32.mrb[0].mxu0
        %v1572 = vadd.f32 0.0, %v1571
        %v1573 = vpop.f32.mrb[0].mxu0
        %1574 = vdwg.mxu0
        %1575 = vmatprep.subr.bf16.mxu0 0
        %1576 = vmatpush1.bf16.msra.mxu0 %v1062
        %1577 = vmatprep.subr.bf16.mxu0 0
        %1578 = vmatpush1.bf16.msra.mxu0 %v1067
        %1579 = vmatprep.subr.bf16.mxu0 0
        %1580 = vmatpush1.bf16.msra.mxu0 %v1072
        %1581 = vmatprep.subr.bf16.mxu0 0
        %1582 = vmatpush1.bf16.msra.mxu0 %v1077
        %1583 = vmatprep.subr.bf16.mxu0 0
        %1584 = vmatpush1.bf16.msra.mxu0 %v1082
        %1585 = vmatprep.subr.bf16.mxu0 0
        %1586 = vmatpush1.bf16.msra.mxu0 %v1087
        %1587 = vmatprep.subr.bf16.mxu0 0
        %1588 = vmatpush1.bf16.msra.mxu0 %v1092
        %1589 = vmatprep.subr.bf16.mxu0 0
        %1590 = vmatpush1.bf16.msra.mxu0 %v1097
        %1591 = vmatprep.subr.bf16.mxu0 0
        %1592 = vmatpush1.bf16.msra.mxu0 0
        %1593 = vmatprep.subr.bf16.mxu0 0
        %1594 = vmatpush1.bf16.msra.mxu0 0
        %1595 = vmatprep.subr.bf16.mxu0 0
        %1596 = vmatpush1.bf16.msra.mxu0 0
        %1597 = vmatprep.subr.bf16.mxu0 0
        %1598 = vmatpush1.bf16.msra.mxu0 0
        %1599 = vmatprep.subr.bf16.mxu0 0
        %1600 = vmatpush1.bf16.msra.mxu0 0
        %1601 = vmatprep.subr.bf16.mxu0 0
        %1602 = vmatpush1.bf16.msra.mxu0 0
        %1603 = vmatprep.subr.bf16.mxu0 0
        %1604 = vmatpush1.bf16.msra.mxu0 0
        %1605 = vmatprep.subr.bf16.mxu0 0
        %1606 = vmatpush1.bf16.msra.mxu0 0
        %1607 = vmatprep.mubr.bf16.mxu0 0
        %1608 = vmatmul.mubr.bf16.gmra.mrb[0].mxu0 %v572
        %v1609 = vpop.f32.mrb[0].mxu0
        %v1610 = vadd.f32 %v1545, %v1609
        %v1611 = vpop.f32.mrb[0].mxu0
        %v1612 = vpop.f32.mrb[0].mxu0
        %v1613 = vadd.f32 %v1548, %v1612
        %v1614 = vpop.f32.mrb[0].mxu0
        %1615 = vmatprep.mubr.bf16.mxu0 0
        %1616 = vmatmul.mubr.bf16.gmra.mrb[0].mxu0 %v575
        %v1617 = vpop.f32.mrb[0].mxu0
        %v1618 = vadd.f32 %v1553, %v1617
        %v1619 = vpop.f32.mrb[0].mxu0
        %v1620 = vpop.f32.mrb[0].mxu0
        %v1621 = vadd.f32 %v1556, %v1620
        %v1622 = vpop.f32.mrb[0].mxu0
        %1623 = vmatprep.mubr.bf16.mxu0 0
        %1624 = vmatmul.mubr.bf16.gmra.mrb[0].mxu0 %v578
        %v1625 = vpop.f32.mrb[0].mxu0
        %v1626 = vadd.f32 %v1561, %v1625
        %v1627 = vpop.f32.mrb[0].mxu0
        %v1628 = vpop.f32.mrb[0].mxu0
        %v1629 = vadd.f32 %v1564, %v1628
        %v1630 = vpop.f32.mrb[0].mxu0
        %1631 = vmatprep.mubr.bf16.mxu0 0
        %1632 = vmatmul.mubr.bf16.gmra.mrb[0].mxu0 %v581
        %v1633 = vpop.f32.mrb[0].mxu0
        %v1634 = vadd.f32 %v1569, %v1633
        %v1635 = vpop.f32.mrb[0].mxu0
        %v1636 = vpop.f32.mrb[0].mxu0
        %v1637 = vadd.f32 %v1572, %v1636
        %v1638 = vpop.f32.mrb[0].mxu0
        %1639 = vdwg.mxu0
        %v1640 = vadd.f32 %v330, %v1326
        %v1641 = vadd.f32 %v331, %v1328
        %v1642 = vadd.f32 %v332, %v1472
        %v1643 = vadd.f32 %v333, %v1474
        %v1644 = vadd.f32 %v334, %v1610
        %v1645 = vadd.f32 %v335, %v1330
        %v1646 = vadd.f32 %v336, %v1332
        %v1647 = vadd.f32 %v337, %v1476
        %v1648 = vadd.f32 %v338, %v1478
        %v1649 = vadd.f32 %v339, %v1613
        %v1650 = vadd.f32 %v340, %v1336
        %v1651 = vadd.f32 %v341, %v1338
        %v1652 = vadd.f32 %v342, %v1482
        %v1653 = vadd.f32 %v343, %v1484
        %v1654 = vadd.f32 %v344, %v1618
        %v1655 = vadd.f32 %v345, %v1340
        %v1656 = vadd.f32 %v346, %v1342
        %v1657 = vadd.f32 %v347, %v1486
        %v1658 = vadd.f32 %v348, %v1488
        %v1659 = vadd.f32 %v349, %v1621
        %v1660 = vadd.f32 %v350, %v1346
        %v1661 = vadd.f32 %v351, %v1348
        %v1662 = vadd.f32 %v352, %v1492
        %v1663 = vadd.f32 %v353, %v1494
        %v1664 = vadd.f32 %v354, %v1626
        %v1665 = vadd.f32 %v355, %v1350
        %v1666 = vadd.f32 %v356, %v1352
        %v1667 = vadd.f32 %v357, %v1496
        %v1668 = vadd.f32 %v358, %v1498
        %v1669 = vadd.f32 %v359, %v1629
        %v1670 = vadd.f32 %v360, %v1356
        %v1671 = vadd.f32 %v361, %v1358
        %v1672 = vadd.f32 %v362, %v1502
        %v1673 = vadd.f32 %v363, %v1504
        %v1674 = vadd.f32 %v364, %v1634
        %v1675 = vadd.f32 %v365, %v1360
        %v1676 = vadd.f32 %v366, %v1362
        %v1677 = vadd.f32 %v367, %v1506
        %v1678 = vadd.f32 %v368, %v1508
        %v1679 = vadd.f32 %v369, %v1637
        %1680 = vst [vmem:[#allocation2] sm:$0xff] %v1640
        %1681 = vst [vmem:[#allocation2 + $0x8] sm:$0xff] %v1641
        %1682 = vst [vmem:[#allocation2 + $0x10] sm:$0xff] %v1642
        %1683 = vst [vmem:[#allocation2 + $0x18] sm:$0xff] %v1643
        %1684 = vst [vmem:[#allocation2 + $0x20] sm:$0xff] %v1644
        %1685 = vst [vmem:[#allocation2 + $0x28] sm:$0xff] %v1645
        %1686 = vst [vmem:[#allocation2 + $0x30] sm:$0xff] %v1646
        %1687 = vst [vmem:[#allocation2 + $0x38] sm:$0xff] %v1647
        %1688 = vst [vmem:[#allocation2 + $0x40] sm:$0xff] %v1648
        %1689 = vst [vmem:[#allocation2 + $0x48] sm:$0xff] %v1649
        %1690 = vst [vmem:[#allocation2 + $0x50] sm:$0xff] %v1650
        %1691 = vst [vmem:[#allocation2 + $0x58] sm:$0xff] %v1651
        %1692 = vst [vmem:[#allocation2 + $0x60] sm:$0xff] %v1652
        %1693 = vst [vmem:[#allocation2 + $0x68] sm:$0xff] %v1653
        %1694 = vst [vmem:[#allocation2 + $0x70] sm:$0xff] %v1654
        %1695 = vst [vmem:[#allocation2 + $0x78] sm:$0xff] %v1655
        %1696 = vst [vmem:[#allocation2 + $0x80] sm:$0xff] %v1656
        %1697 = vst [vmem:[#allocation2 + $0x88] sm:$0xff] %v1657
        %1698 = vst [vmem:[#allocation2 + $0x90] sm:$0xff] %v1658
        %1699 = vst [vmem:[#allocation2 + $0x98] sm:$0xff] %v1659
        %1700 = vst [vmem:[#allocation2 + $0xa0] sm:$0xff] %v1660
        %1701 = vst [vmem:[#allocation2 + $0xa8] sm:$0xff] %v1661
        %1702 = vst [vmem:[#allocation2 + $0xb0] sm:$0xff] %v1662
        %1703 = vst [vmem:[#allocation2 + $0xb8] sm:$0xff] %v1663
        %1704 = vst [vmem:[#allocation2 + $0xc0] sm:$0xff] %v1664
        %1705 = vst [vmem:[#allocation2 + $0xc8] sm:$0xff] %v1665
        %1706 = vst [vmem:[#allocation2 + $0xd0] sm:$0xff] %v1666
        %1707 = vst [vmem:[#allocation2 + $0xd8] sm:$0xff] %v1667
        %1708 = vst [vmem:[#allocation2 + $0xe0] sm:$0xff] %v1668
        %1709 = vst [vmem:[#allocation2 + $0xe8] sm:$0xff] %v1669
        %1710 = vst [vmem:[#allocation2 + $0xf0] sm:$0xff] %v1670
        %1711 = vst [vmem:[#allocation2 + $0xf8] sm:$0xff] %v1671
        %1712 = vst [vmem:[#allocation2 + $0x100] sm:$0xff] %v1672
        %1713 = vst [vmem:[#allocation2 + $0x108] sm:$0xff] %v1673
        %1714 = vst [vmem:[#allocation2 + $0x110] sm:$0xff] %v1674
        %1715 = vst [vmem:[#allocation2 + $0x118] sm:$0xff] %v1675
        %1716 = vst [vmem:[#allocation2 + $0x120] sm:$0xff] %v1676
        %1717 = vst [vmem:[#allocation2 + $0x128] sm:$0xff] %v1677
        %1718 = vst [vmem:[#allocation2 + $0x130] sm:$0xff] %v1678
        %1719 = vst [vmem:[#allocation2 + $0x138] sm:$0xff] %v1679
        %p1720 = scmp.eq.s32.totalorder %s30, 1
        // Predicated region
        $region45: #{tpu_custom_call.1} parent=31 // pred_check
          %p1721 = pneg %p1720
        $region46: #{tpu_custom_call.1} parent=31 // pred_check_branch
          %1723 = sbr.rel (%p1721) target = $region48
        $region47: #{tpu_custom_call.1} parent=31 // pred_region
          %v1724 = vld [vmem:[#allocation2] sm:$0xff]
          %v1725 = vld [vmem:[#allocation2 + $0x8] sm:$0xff]
          %v1726 = vld [vmem:[#allocation2 + $0x10] sm:$0xff]
          %v1727 = vld [vmem:[#allocation2 + $0x18] sm:$0xff]
          %v1728 = vld [vmem:[#allocation2 + $0x20] sm:$0xff]
          %v1729 = vld [vmem:[#allocation2 + $0x28] sm:$0xff]
          %v1730 = vld [vmem:[#allocation2 + $0x30] sm:$0xff]
          %v1731 = vld [vmem:[#allocation2 + $0x38] sm:$0xff]
          %v1732 = vld [vmem:[#allocation2 + $0x40] sm:$0xff]
          %v1733 = vld [vmem:[#allocation2 + $0x48] sm:$0xff]
          %v1734 = vld [vmem:[#allocation2 + $0x50] sm:$0xff]
          %v1735 = vld [vmem:[#allocation2 + $0x58] sm:$0xff]
          %v1736 = vld [vmem:[#allocation2 + $0x60] sm:$0xff]
          %v1737 = vld [vmem:[#allocation2 + $0x68] sm:$0xff]
          %v1738 = vld [vmem:[#allocation2 + $0x70] sm:$0xff]
          %v1739 = vld [vmem:[#allocation2 + $0x78] sm:$0xff]
          %v1740 = vld [vmem:[#allocation2 + $0x80] sm:$0xff]
          %v1741 = vld [vmem:[#allocation2 + $0x88] sm:$0xff]
          %v1742 = vld [vmem:[#allocation2 + $0x90] sm:$0xff]
          %v1743 = vld [vmem:[#allocation2 + $0x98] sm:$0xff]
          %v1744 = vld [vmem:[#allocation2 + $0xa0] sm:$0xff]
          %v1745 = vld [vmem:[#allocation2 + $0xa8] sm:$0xff]
          %v1746 = vld [vmem:[#allocation2 + $0xb0] sm:$0xff]
          %v1747 = vld [vmem:[#allocation2 + $0xb8] sm:$0xff]
          %v1748 = vld [vmem:[#allocation2 + $0xc0] sm:$0xff]
          %v1749 = vld [vmem:[#allocation2 + $0xc8] sm:$0xff]
          %v1750 = vld [vmem:[#allocation2 + $0xd0] sm:$0xff]
          %v1751 = vld [vmem:[#allocation2 + $0xd8] sm:$0xff]
          %v1752 = vld [vmem:[#allocation2 + $0xe0] sm:$0xff]
          %v1753 = vld [vmem:[#allocation2 + $0xe8] sm:$0xff]
          %v1754 = vld [vmem:[#allocation2 + $0xf0] sm:$0xff]
          %v1755 = vld [vmem:[#allocation2 + $0xf8] sm:$0xff]
          %v1756 = vld [vmem:[#allocation2 + $0x100] sm:$0xff]
          %v1757 = vld [vmem:[#allocation2 + $0x108] sm:$0xff]
          %v1758 = vld [vmem:[#allocation2 + $0x110] sm:$0xff]
          %v1759 = vld [vmem:[#allocation2 + $0x118] sm:$0xff]
          %v1760 = vld [vmem:[#allocation2 + $0x120] sm:$0xff]
          %v1761 = vld [vmem:[#allocation2 + $0x128] sm:$0xff]
          %v1762 = vld [vmem:[#allocation2 + $0x130] sm:$0xff]
          %v1763 = vld [vmem:[#allocation2 + $0x138] sm:$0xff]
          %v1764 = vld [vmem:[%s281] sm:$0x1f]
          %v1766 = vlaneseq
          %v1767 = vshrl.u32 %v1766, 7
          %v1768 = vsub.s32 0, %v1767
          %v1769 = vrot.slane %v1764, %v1768
          %v1770 = vlaneseq
          %v1771 = vshrl.u32 %v1770, 7
          %v1772 = vsub.s32 1, %v1771
          %v1773 = vrot.slane %v1764, %v1772
          %v1774 = vlaneseq
          %v1775 = vshrl.u32 %v1774, 7
          %v1776 = vsub.s32 2, %v1775
          %v1777 = vrot.slane %v1764, %v1776
          %v1778 = vlaneseq
          %v1779 = vshrl.u32 %v1778, 7
          %v1780 = vsub.s32 3, %v1779
          %v1781 = vrot.slane %v1764, %v1780
          %v1782 = vlaneseq
          %v1783 = vshrl.u32 %v1782, 7
          %v1784 = vsub.s32 4, %v1783
          %v1785 = vrot.slane %v1764, %v1784
          %v1791 = vadd.f32 %v1724, %v1769
          %v1792 = vadd.f32 %v1725, %v1773
          %v1793 = vadd.f32 %v1726, %v1777
          %v1794 = vadd.f32 %v1727, %v1781
          %v1795 = vadd.f32 %v1728, %v1785
          %v1796 = vadd.f32 %v1729, %v1769
          %v1797 = vadd.f32 %v1730, %v1773
          %v1798 = vadd.f32 %v1731, %v1777
          %v1799 = vadd.f32 %v1732, %v1781
          %v1800 = vadd.f32 %v1733, %v1785
          %v1801 = vadd.f32 %v1734, %v1769
          %v1802 = vadd.f32 %v1735, %v1773
          %v1803 = vadd.f32 %v1736, %v1777
          %v1804 = vadd.f32 %v1737, %v1781
          %v1805 = vadd.f32 %v1738, %v1785
          %v1806 = vadd.f32 %v1739, %v1769
          %v1807 = vadd.f32 %v1740, %v1773
          %v1808 = vadd.f32 %v1741, %v1777
          %v1809 = vadd.f32 %v1742, %v1781
          %v1810 = vadd.f32 %v1743, %v1785
          %v1811 = vadd.f32 %v1744, %v1769
          %v1812 = vadd.f32 %v1745, %v1773
          %v1813 = vadd.f32 %v1746, %v1777
          %v1814 = vadd.f32 %v1747, %v1781
          %v1815 = vadd.f32 %v1748, %v1785
          %v1816 = vadd.f32 %v1749, %v1769
          %v1817 = vadd.f32 %v1750, %v1773
          %v1818 = vadd.f32 %v1751, %v1777
          %v1819 = vadd.f32 %v1752, %v1781
          %v1820 = vadd.f32 %v1753, %v1785
          %v1821 = vadd.f32 %v1754, %v1769
          %v1822 = vadd.f32 %v1755, %v1773
          %v1823 = vadd.f32 %v1756, %v1777
          %v1824 = vadd.f32 %v1757, %v1781
          %v1825 = vadd.f32 %v1758, %v1785
          %v1826 = vadd.f32 %v1759, %v1769
          %v1827 = vadd.f32 %v1760, %v1773
          %v1828 = vadd.f32 %v1761, %v1777
          %v1829 = vadd.f32 %v1762, %v1781
          %v1830 = vadd.f32 %v1763, %v1785
          %1831 = vst [vmem:[%s273] sm:$0xff] %v1791
          %1832 = vst [vmem:[%s273 + $0x8] sm:$0xff] %v1792
          %1833 = vst [vmem:[%s273 + $0x10] sm:$0xff] %v1793
          %1834 = vst [vmem:[%s273 + $0x18] sm:$0xff] %v1794
          %1835 = vst [vmem:[%s273 + $0x20] sm:$0xff] %v1795
          %1836 = vst [vmem:[%s273 + $0x28] sm:$0xff] %v1796
          %1837 = vst [vmem:[%s273 + $0x30] sm:$0xff] %v1797
          %1838 = vst [vmem:[%s273 + $0x38] sm:$0xff] %v1798
          %1839 = vst [vmem:[%s273 + $0x40] sm:$0xff] %v1799
          %1840 = vst [vmem:[%s273 + $0x48] sm:$0xff] %v1800
          %1841 = vst [vmem:[%s273 + $0x50] sm:$0xff] %v1801
          %1842 = vst [vmem:[%s273 + $0x58] sm:$0xff] %v1802
          %1843 = vst [vmem:[%s273 + $0x60] sm:$0xff] %v1803
          %1844 = vst [vmem:[%s273 + $0x68] sm:$0xff] %v1804
          %1845 = vst [vmem:[%s273 + $0x70] sm:$0xff] %v1805
          %1846 = vst [vmem:[%s273 + $0x78] sm:$0xff] %v1806
          %1847 = vst [vmem:[%s273 + $0x80] sm:$0xff] %v1807
          %1848 = vst [vmem:[%s273 + $0x88] sm:$0xff] %v1808
          %1849 = vst [vmem:[%s273 + $0x90] sm:$0xff] %v1809
          %1850 = vst [vmem:[%s273 + $0x98] sm:$0xff] %v1810
          %1851 = vst [vmem:[%s273 + $0xa0] sm:$0xff] %v1811
          %1852 = vst [vmem:[%s273 + $0xa8] sm:$0xff] %v1812
          %1853 = vst [vmem:[%s273 + $0xb0] sm:$0xff] %v1813
          %1854 = vst [vmem:[%s273 + $0xb8] sm:$0xff] %v1814
          %1855 = vst [vmem:[%s273 + $0xc0] sm:$0xff] %v1815
          %1856 = vst [vmem:[%s273 + $0xc8] sm:$0xff] %v1816
          %1857 = vst [vmem:[%s273 + $0xd0] sm:$0xff] %v1817
          %1858 = vst [vmem:[%s273 + $0xd8] sm:$0xff] %v1818
          %1859 = vst [vmem:[%s273 + $0xe0] sm:$0xff] %v1819
          %1860 = vst [vmem:[%s273 + $0xe8] sm:$0xff] %v1820
          %1861 = vst [vmem:[%s273 + $0xf0] sm:$0xff] %v1821
          %1862 = vst [vmem:[%s273 + $0xf8] sm:$0xff] %v1822
          %1863 = vst [vmem:[%s273 + $0x100] sm:$0xff] %v1823
          %1864 = vst [vmem:[%s273 + $0x108] sm:$0xff] %v1824
          %1865 = vst [vmem:[%s273 + $0x110] sm:$0xff] %v1825
          %1866 = vst [vmem:[%s273 + $0x118] sm:$0xff] %v1826
          %1867 = vst [vmem:[%s273 + $0x120] sm:$0xff] %v1827
          %1868 = vst [vmem:[%s273 + $0x128] sm:$0xff] %v1828
          %1869 = vst [vmem:[%s273 + $0x130] sm:$0xff] %v1829
          %1870 = vst [vmem:[%s273 + $0x138] sm:$0xff] %v1830
        $region48: #{tpu_custom_call.1} parent=31 // pred_fallthru
          _
        %s1871 = sand.u32 %s134, 1
        %s1872 = scalar_lea.sflag [#allocation5], %s1871
        %s1873 = sand.u32 %s134, 1
        %s1874 = smul.addr %s1873, 320
        %s1875 = scalar_lea.vmem [#allocation8], %s1874
        // Predicated region
        $region49: #{tpu_custom_call.1} parent=31 // pred_check
          %p1876 = pneg %p144
        $region50: #{tpu_custom_call.1} parent=31 // pred_check_branch
          %1878 = sbr.rel (%p1876) target = $region52
        $region51: #{tpu_custom_call.1} parent=31 // pred_region
          %s1879 = smul.u32 8, %s28
          %s1880 = smul.u32 5, %s29
          %s1882 = ssub.s32 5120, 5120
          %1883 = vsyncadd %s1872, %s1882
          %s1884 = smul.addr %s1879, 5
          %s1885 = sadd.s32 %s1880, %s1884
          %s1886 = smul.addr %s1885, 128
          %s1887 = scalar_lea.hbm %s3, %s1886
          %s1888 = sshll.u32 %s1875, 4
          %s1889 = int_to_ptr.vmem [resolvable:$true] %s1888
          %1894 = dma.vmem_to_hbm [thread:$0]  %s1889, 5120, %s1887, %s1872, 640, 640, 40
        $region52: #{tpu_custom_call.1} parent=31 // pred_fallthru
          _
      $region32: #{tpu_custom_call.1} parent=5 // pred_fallthru
        _
      %p1895 = scmp.le.s32.totalorder 2, %s18
      // Predicated region
      $region53: #{tpu_custom_call.1} parent=5 // pred_check
        %p1896 = pneg %p1895
      $region54: #{tpu_custom_call.1} parent=5 // pred_check_branch
        %1898 = sbr.rel (%p1896) target = $region56
      $region55: #{tpu_custom_call.1} parent=5 // pred_region
        %s1899 = ssub.s32 %s18, 2
        // Predicated region
        $region57: #{tpu_custom_call.1} parent=55 // pred_check
          %p1900 = pneg %p150
        $region58: #{tpu_custom_call.1} parent=55 // pred_check_branch
          %1902 = sbr.rel (%p1900) target = $region60
        $region59: #{tpu_custom_call.1} parent=55 // pred_region
          %s1903 = sand.u32 %s135, 1
          %s1904 = scalar_lea.sflag [#allocation5], %s1903
          %s1905 = sand.u32 %s135, 1
          %s1906 = smul.addr %s1905, 320
          %s1907 = scalar_lea.vmem [#allocation8], %s1906
          %1908 = dma.done %s1904, 5120
        $region60: #{tpu_custom_call.1} parent=55 // pred_fallthru
          _
      $region56: #{tpu_custom_call.1} parent=5 // pred_fallthru
        _
    $region6: #{tpu_custom_call.1} parent=1 // loop_footer
      %s22 = sadd.s32 1, %s18
    $region7: #{tpu_custom_call.1} parent=1 // loop_footer_branch
      %17 = sbr.rel target = $region3
    $region8: #{tpu_custom_call.1} parent=1 // loop_exit
      _
    %1909 = vsyncpa [#allocation4], 1
    %s1910 = scalar_lea.sflag [#allocation4], 1
    %1911 = vsyncpa %s1910, 1
    %1912 = vsyncpa [#allocation7], 1
    %s1913 = scalar_lea.sflag [#allocation7], 1
    %1914 = vsyncpa %s1913, 1
    %1915 = vsyncpa [#allocation5], 1
    %s1916 = scalar_lea.sflag [#allocation5], 1
    %1917 = vsyncpa %s1916, 1

</llo_original>
